<compile_context>
chip_gen: v7x
topology: tpu7x:2x2x1
jax: 0.10.0
libtpu: 0.0.40
codegen_flags: <defaults>
</compile_context>

<pallas_src>
import functools

import jax
import jax.numpy as jnp
from jax.experimental import pallas as pl
from jax.experimental.pallas import tpu as pltpu

HIDDEN = 2048  # fixed by the PyTorch module: nn.Linear(rearranged_dim, 2048)


# ----------------------------------------------------------------------------
# Small device queries (static, outside jit)
# ----------------------------------------------------------------------------
def _device_kind():
    try:
        return jax.devices()[0].device_kind.lower()
    except Exception:
        return ""


def _use_bf16_epilogue():
    # v5e has no bf16 VALU -> keep the first-layer epilogue in f32 there.
    kind = _device_kind()
    return not ("v5 lite" in kind or "v5e" in kind or "v5lite" in kind)


def _num_tensorcores():
    # v7x has 2 TensorCores per chip.
    kind = _device_kind()
    return 2 if ("v7" in kind or "tpu7" in kind) else 1


# ----------------------------------------------------------------------------
# Pallas kernel: fused  Linear(K -> 2048) -> ReLU -> Linear(2048 -> Npad)
# ----------------------------------------------------------------------------
def projector_kernel(x_ref, w1_ref, b1_ref, w2_ref, b2_ref, o_ref, *,
                     bf16_epilogue):
    # x_ref : (TM, K)       bf16   (K = audio_hidden * downsampling_k)
    # w1_ref: (K, 2048)     bf16   (transposed from PyTorch (2048, K)), resident
    # b1_ref: (1, 2048)     bf16
    # w2_ref: (2048, Npad)  bf16   (transposed, lane-padded to multiple of 128)
    # b2_ref: (1, Npad)     bf16
    # o_ref : (TM, Npad)    bf16   lane-dense output block
    x = x_ref[...]

    # First linear (MXU, f32 accumulation) + bias + ReLU.
    h = jnp.dot(x, w1_ref[...], preferred_element_type=jnp.float32)
    if bf16_epilogue:
        # v6e/v7x: bf16 epilogue halves the staged (TM, 2048) intermediate.
        h = h.astype(jnp.bfloat16) + b1_ref[...]
        h = jnp.maximum(h, 0).astype(jnp.bfloat16)
    else:
        # v5e: f32 VPU only.
        h = h + b1_ref[...].astype(jnp.float32)
        h = jnp.maximum(h, 0.0).astype(jnp.bfloat16)

    # Second linear + bias.
    y = jnp.dot(h, w2_ref[...], preferred_element_type=jnp.float32)
    y = y + b2_ref[...].astype(jnp.float32)
    o_ref[...] = y.astype(o_ref.dtype)


def _const_spec(shape):
    """Grid-resident (constant block index) spec, single-buffered.

    Pallas allocates 2 VMEM buffers per input by default even when the block
    index never changes; Buffered(1) halves the weight footprint."""
    index_map = lambda i: (0, 0)
    try:
        return pl.BlockSpec(shape, index_map, pipeline_mode=pl.Buffered(1))
    except (TypeError, AttributeError):  # older API without pipeline_mode
        return pl.BlockSpec(shape, index_map)


def _projector_matmul(x2d, w1_t, b1, w2_t, b2, *, tm, bf16_epilogue):
    """x2d: (M, K) bf16; returns (M, Npad) bf16.  Trailing partial row block
    (M % tm != 0) is handled by Pallas — no sublane padding of x needed."""
    m, k = x2d.shape
    hid = w1_t.shape[1]
    n_pad = w2_t.shape[1]
    grid_m = pl.cdiv(m, tm)

    flops = 2 * m * k * hid + 2 * m * hid * n_pad
    weight_bytes = (w1_t.size + b1.size + w2_t.size + b2.size) * 2  # bf16
    bytes_accessed = x2d.size * 2 + weight_bytes + m * n_pad * 2

    # Explicit scoped-VMEM budget from actual tile + weight sizes (defaults:
    # 16 MiB on v5e / 32 MiB on v6e/v7x are too small at realistic K).
    io_bytes = 2 * (tm * k + tm * n_pad) * 2                 # 2x-buffered x / out
    interm_bytes = tm * hid * (2 if bf16_epilogue else 4) * 2
    vmem_limit = min(max(2 * (weight_bytes + io_bytes + interm_bytes), 32 << 20),
                     64 << 20)

    kernel = functools.partial(projector_kernel, bf16_epilogue=bf16_epilogue)
    return pl.pallas_call(
        kernel,
        out_shape=jax.ShapeDtypeStruct((m, n_pad), jnp.bfloat16),
        grid_spec=pltpu.PrefetchScalarGridSpec(
            num_scalar_prefetch=0,
            grid=(grid_m,),
            in_specs=[
                pl.BlockSpec((tm, k), lambda i: (i, 0)),  # x row tile
                _const_spec((k, hid)),                    # W1^T (resident)
                _const_spec((1, hid)),                    # b1   (resident)
                _const_spec((hid, n_pad)),                # W2^T (resident)
                _const_spec((1, n_pad)),                  # b2   (resident)
            ],
            out_specs=pl.BlockSpec((tm, n_pad), lambda i: (i, 0)),
        ),
        compiler_params=pltpu.CompilerParams(
            dimension_semantics=("parallel",),  # row blocks independent
            vmem_limit_bytes=int(vmem_limit),
        ),
        cost_estimate=pl.CostEstimate(
            flops=flops, transcendentals=0, bytes_accessed=bytes_accessed),
    )(x2d, w1_t, b1, w2_t, b2)


# ----------------------------------------------------------------------------
# Parameter prep (one-time, outside the forward pass / jit)
# ----------------------------------------------------------------------------
def prepare_params(params):
    """Pad the narrow output dim of W2/b2 up to a multiple of 128 lanes ONCE,
    so every kernel store is a full-width vst.  Returns (params, text_hidden).
    (Padding only to 128 — padding to 256 for the wide MXU would just waste
    50% of the second matmul's FLOPs.)"""
    w1_t, b1, w2_t, b2 = params
    n = w2_t.shape[1]
    n_pad = ((n + 127) // 128) * 128
    if n_pad != n:
        w2_t = jnp.pad(w2_t, ((0, 0), (0, n_pad - n)))
        b2 = jnp.pad(b2, ((0, 0), (0, n_pad - n)))
    return (w1_t, b1, w2_t, b2), n


# ----------------------------------------------------------------------------
# Module-equivalent forward (glue: truncate / rearrange in plain JAX)
# ----------------------------------------------------------------------------
def projector_forward(x, prepared_params, *, text_hidden, downsampling_k,
                      tm_target=256, bf16_epilogue=True, num_cores=1):
    """
    x: (B, S, audio_hidden) bf16
    Equivalent of:
      x = x[:, : S // k * k, :]
      x = rearrange(x, 'b (s k) d -> b s (k d)')
      x = Linear(k*d, 2048)(x); ReLU; Linear(2048, text_hidden)(x)
    """
    w1_t, b1, w2_t, b2 = prepared_params
    b, s, d = x.shape
    k = downsampling_k
    new_s = (s // k) * k
    s_ds = new_s // k
    m = b * s_ds
    # 'b (s k) d -> b s (k d)' then flatten tokens: one contiguous reshape.
    x2d = x[:, :new_s, :].reshape(m, k * d)

    # Row tile: as large as possible (amortize per-grid-step overhead). No
    # sublane padding: tm is either a multiple of 8 or equals the full M, and
    # the trailing partial block is handled (and write-masked) by Pallas.
    if m <= tm_target:
        tm = m
    else:
        tm = max(8, (tm_target // 8) * 8)
    if num_cores >= 2 and pl.cdiv(m, tm) == 1 and m > 16:
        # v7x: split a single-block workload across the two TensorCores.
        tm_half = (((m + 1) // 2) + 7) // 8 * 8
        if tm_half < m:
            tm = tm_half

    y2d = _projector_matmul(x2d, w1_t, b1, w2_t, b2, tm=tm,
                            bf16_epilogue=bf16_epilogue)
    return y2d[:m, :text_hidden].reshape(b, s_ds, text_hidden)


# ----------------------------------------------------------------------------
# Synthetic init (nn.Linear-shaped params, stored transposed for the kernel)
# ----------------------------------------------------------------------------
def init_params(key, audio_hidden, text_hidden, downsampling_k):
    rearranged_dim = audio_hidden * downsampling_k
    hid = HIDDEN
    k1, k2, k3, k4 = jax.random.split(key, 4)
    bound1 = 1.0 / (rearranged_dim ** 0.5)
    bound2 = 1.0 / (hid ** 0.5)
    w1_t = jax.random.uniform(k1, (rearranged_dim, hid), jnp.float32,
                              -bound1, bound1).astype(jnp.bfloat16)
    b1 = jax.random.uniform(k2, (1, hid), jnp.float32,
                            -bound1, bound1).astype(jnp.bfloat16)
    w2_t = jax.random.uniform(k3, (hid, text_hidden), jnp.float32,
                              -bound2, bound2).astype(jnp.bfloat16)
    b2 = jax.random.uniform(k4, (1, text_hidden), jnp.float32,
                            -bound2, bound2).astype(jnp.bfloat16)
    return (w1_t, b1, w2_t, b2)


def _reference(x, params, downsampling_k):
    w1_t, b1, w2_t, b2 = params
    b, s, d = x.shape
    k = downsampling_k
    new_s = (s // k) * k
    xr = x[:, :new_s, :].reshape(b, new_s // k, k * d)
    h = jnp.maximum(
        jnp.dot(xr, w1_t, preferred_element_type=jnp.float32)
        + b1.astype(jnp.float32), 0.0).astype(jnp.bfloat16)
    y = (jnp.dot(h, w2_t, preferred_element_type=jnp.float32)
         + b2.astype(jnp.float32)).astype(jnp.bfloat16)
    return y


if __name__ == "__main__":
    # Small shapes consistent with the module's forward:
    #   audio_encoder_hidden_size=32, text_decoder_hidden_size=64, k=4
    audio_hidden = 32
    text_hidden = 64
    downsampling_k = 4

    key = jax.random.PRNGKey(0)
    kx1, kx2, kx3, kp = jax.random.split(key, 4)
    raw_params = init_params(kp, audio_hidden, text_hidden, downsampling_k)
    params, n_out = prepare_params(raw_params)   # one-time lane padding

    bf16_ep = _use_bf16_epilogue()
    n_cores = _num_tensorcores()

    fwd = jax.jit(functools.partial(
        projector_forward, text_hidden=n_out, downsampling_k=downsampling_k,
        bf16_epilogue=bf16_ep, num_cores=n_cores))

    # Test 1: seq not divisible by k -> truncation path; M=8, single block.
    x1 = jax.random.normal(kx1, (2, 18, audio_hidden),
                           jnp.float32).astype(jnp.bfloat16)
    y1 = fwd(x1, params)
    jax.block_until_ready(y1)
    y1_ref = _reference(x1, raw_params, downsampling_k)
    assert y1.shape == (2, 18 // downsampling_k, text_hidden)
    assert y1.dtype == jnp.bfloat16
    assert jnp.allclose(y1.astype(jnp.float32), y1_ref.astype(jnp.float32),
                        atol=2e-2, rtol=2e-2)

    # Test 2: multi-step grid with a trailing PARTIAL row block
    #         (M=12, tm=8 -> blocks of 8 and 4; no sublane padding of x).
    fwd_small = jax.jit(functools.partial(
        projector_forward, text_hidden=n_out, downsampling_k=downsampling_k,
        tm_target=8, bf16_epilogue=bf16_ep, num_cores=1))
    x2 = jax.random.normal(kx2, (3, 18, audio_hidden),
                           jnp.float32).astype(jnp.bfloat16)
    y2 = fwd_small(x2, params)
    jax.block_until_ready(y2)
    y2_ref = _reference(x2, raw_params, downsampling_k)
    assert y2.shape == (3, 18 // downsampling_k, text_hidden)
    assert jnp.allclose(y2.astype(jnp.float32), y2_ref.astype(jnp.float32),
                        atol=2e-2, rtol=2e-2)

    # Test 3: M not a multiple of 8 (M=9) -> single full-M block, no padding.
    x3 = jax.random.normal(kx3, (3, 12, audio_hidden),
                           jnp.float32).astype(jnp.bfloat16)
    y3 = fwd(x3, params)
    jax.block_until_ready(y3)
    y3_ref = _reference(x3, raw_params, downsampling_k)
    assert y3.shape == (3, 12 // downsampling_k, text_hidden)
    assert jnp.allclose(y3.astype(jnp.float32), y3_ref.astype(jnp.float32),
                        atol=2e-2, rtol=2e-2)

    print("KERNEL_OK")
</pallas_src>

<mosaic_0001>
module attributes {stable_mosaic.version = 11 : i64} {
  func.func @projector_kernel(%arg0: i32, %arg1: memref<8x128xbf16, #tpu.memory_space<vmem>>, %arg2: memref<128x2048xbf16, #tpu.memory_space<vmem>>, %arg3: memref<1x2048xbf16, #tpu.memory_space<vmem>>, %arg4: memref<2048x128xbf16, #tpu.memory_space<vmem>>, %arg5: memref<1x128xbf16, #tpu.memory_space<vmem>>, %arg6: memref<8x128xbf16, #tpu.memory_space<vmem>>) attributes {dimension_semantics = [#tpu.dimension_semantics<parallel>], iteration_bounds = array<i64: 1>, scalar_prefetch = 0 : i64, scratch_operands = 0 : i64, tpu.core_type = #tpu.core_type<tc>, window_params = [{transform_indices = @transform_0, window_bounds = array<i64: 8, 128>}, {pipeline_mode = #tpu.pipeline_mode<synchronous>, transform_indices = @transform_1, window_bounds = array<i64: 128, 2048>}, {pipeline_mode = #tpu.pipeline_mode<synchronous>, transform_indices = @transform_2, window_bounds = array<i64: 1, 2048>}, {pipeline_mode = #tpu.pipeline_mode<synchronous>, transform_indices = @transform_3, window_bounds = array<i64: 2048, 128>}, {pipeline_mode = #tpu.pipeline_mode<synchronous>, transform_indices = @transform_4, window_bounds = array<i64: 1, 128>}, {transform_indices = @transform_5, window_bounds = array<i64: 8, 128>}]} {
    %c0 = arith.constant 0 : index
    %c0_0 = arith.constant 0 : index
    %0 = vector.load %arg1[%c0, %c0_0] : memref<8x128xbf16, #tpu.memory_space<vmem>>, vector<8x128xbf16>
    %c0_1 = arith.constant 0 : index
    %c0_2 = arith.constant 0 : index
    %1 = vector.load %arg2[%c0_1, %c0_2] : memref<128x2048xbf16, #tpu.memory_space<vmem>>, vector<128x2048xbf16>
    %cst = arith.constant dense<0.000000e+00> : vector<8x2048xf32>
    %2 = tpu.matmul %0, %1, %cst {dimension_numbers = #tpu.dot_dimension_numbers<[1], [0], [0], [1], [0, 0, 1, 1], [], []>} : vector<8x128xbf16>, vector<128x2048xbf16>, vector<8x2048xf32> -> vector<8x2048xf32>
    %3 = arith.truncf %2 : vector<8x2048xf32> to vector<8x2048xbf16>
    %c0_3 = arith.constant 0 : index
    %c0_4 = arith.constant 0 : index
    %4 = vector.load %arg3[%c0_3, %c0_4] : memref<1x2048xbf16, #tpu.memory_space<vmem>>, vector<1x2048xbf16>
    %5 = vector.broadcast %4 : vector<1x2048xbf16> to vector<8x2048xbf16>
    %6 = arith.addf %3, %5 : vector<8x2048xbf16>
    %cst_5 = arith.constant 0.000000e+00 : bf16
    %7 = vector.broadcast %cst_5 : bf16 to vector<8x2048xbf16>
    %8 = arith.maximumf %6, %7 : vector<8x2048xbf16>
    %c0_6 = arith.constant 0 : index
    %c0_7 = arith.constant 0 : index
    %9 = vector.load %arg4[%c0_6, %c0_7] : memref<2048x128xbf16, #tpu.memory_space<vmem>>, vector<2048x128xbf16>
    %cst_8 = arith.constant dense<0.000000e+00> : vector<8x128xf32>
    %10 = tpu.matmul %8, %9, %cst_8 {dimension_numbers = #tpu.dot_dimension_numbers<[1], [0], [0], [1], [0, 0, 1, 1], [], []>} : vector<8x2048xbf16>, vector<2048x128xbf16>, vector<8x128xf32> -> vector<8x128xf32>
    %c0_9 = arith.constant 0 : index
    %c0_10 = arith.constant 0 : index
    %11 = vector.load %arg5[%c0_9, %c0_10] : memref<1x128xbf16, #tpu.memory_space<vmem>>, vector<1x128xbf16>
    %12 = arith.extf %11 : vector<1x128xbf16> to vector<1x128xf32>
    %13 = vector.broadcast %12 : vector<1x128xf32> to vector<8x128xf32>
    %14 = arith.addf %10, %13 : vector<8x128xf32>
    %15 = arith.truncf %14 : vector<8x128xf32> to vector<8x128xbf16>
    %c0_11 = arith.constant 0 : index
    %c0_12 = arith.constant 0 : index
    %16 = vector.load %arg6[%c0_11, %c0_12] : memref<8x128xbf16, #tpu.memory_space<vmem>>, vector<8x128xbf16>
    tpu.vector_store %arg6[%c0_11, %c0_12], %15 {strides = array<i32>} : memref<8x128xbf16, #tpu.memory_space<vmem>>, vector<8x128xbf16>,
    return
  }
  func.func @transform_0(%arg0: i32) -> (i32, i32) {
    %c0_i32 = arith.constant 0 : i32
    %c0_i32_0 = arith.constant 0 : i32
    return %arg0, %c0_i32 : i32, i32
  }
  func.func @transform_1(%arg0: i32) -> (i32, i32) {
    %c0_i32 = arith.constant 0 : i32
    %c0_i32_0 = arith.constant 0 : i32
    %c0_i32_1 = arith.constant 0 : i32
    return %c0_i32, %c0_i32_0 : i32, i32
  }
  func.func @transform_2(%arg0: i32) -> (i32, i32) {
    %c0_i32 = arith.constant 0 : i32
    %c0_i32_0 = arith.constant 0 : i32
    %c0_i32_1 = arith.constant 0 : i32
    return %c0_i32, %c0_i32_0 : i32, i32
  }
  func.func @transform_3(%arg0: i32) -> (i32, i32) {
    %c0_i32 = arith.constant 0 : i32
    %c0_i32_0 = arith.constant 0 : i32
    %c0_i32_1 = arith.constant 0 : i32
    return %c0_i32, %c0_i32_0 : i32, i32
  }
  func.func @transform_4(%arg0: i32) -> (i32, i32) {
    %c0_i32 = arith.constant 0 : i32
    %c0_i32_0 = arith.constant 0 : i32
    %c0_i32_1 = arith.constant 0 : i32
    return %c0_i32, %c0_i32_0 : i32, i32
  }
  func.func @transform_5(%arg0: i32) -> (i32, i32) {
    %c0_i32 = arith.constant 0 : i32
    %c0_i32_0 = arith.constant 0 : i32
    return %arg0, %c0_i32 : i32, i32
  }
}

</mosaic_0001>

<llo_original>
// kernel: projector_forward.1
$region0: #{projector_forward.1}
  #allocation0 [shape = 'u32[]', space=smem, size = 0x4, offset = 0x4, fixed_abs, tag = 'smem constant byte address 0x4 - core index']
  #allocation1 [shape = 'u32[144,128]{1,0:T(1,128)}', space=vmem, size = 0x12000, scoped, tag = 'internal scratch']
  %s0 = inlined_call_operand.vmem [shape: bf16[8,128], index: 0, kind: input, shape index: {}]
  %s1 = inlined_call_operand.hbm [shape: bf16[128,2048], index: 1, kind: input, shape index: {}]
  %s2 = inlined_call_operand.vmem [shape: bf16[1,2048], index: 2, kind: input, shape index: {}]
  %s3 = inlined_call_operand.hbm [shape: bf16[2048,128], index: 3, kind: input, shape index: {}]
  %s4 = inlined_call_operand.vmem [shape: bf16[1,128], index: 4, kind: input, shape index: {}]
  %s5 = inlined_call_operand.hbm [shape: bf16[8,128], index: 5, kind: output, shape index: {}]
  %s6 = sld [smem:[#allocation0]]
  $region38: #{projector_forward.1} parent=0
    _
  %s8 = ssub.s32 1, %s6
  %s9 = scalar_select 0, %s8, %s6
  $region1: #{projector_forward.1} parent=0
    #allocation2 [shape = 'u8[524288]{0}', space=vmem, size = 0x80000, scoped, tag = 'input window, operand 1, single buffered']
    #allocation3 [shape = 's32[1]{0}', space=sflag, size = 0x4, scoped, tag = 'scoped memory for projector_forward.1']
    #allocation4 [shape = 's32[1]{0}', space=sflag, size = 0x4, scoped, tag = 'scoped memory for projector_forward.1']
    #allocation5 [shape = 'u8[524288]{0}', space=vmem, size = 0x80000, scoped, tag = 'input window, operand 3, single buffered']
    #allocation6 [shape = 's32[1]{0}', space=sflag, size = 0x4, scoped, tag = 'scoped memory for projector_forward.1']
    #allocation7 [shape = 'u8[2048]{0}', space=vmem, size = 0x800, scoped, tag = 'output window, operand 0, single buffered']
    %10 = vsyncpa [#allocation3], 0
    %11 = vsyncpa [#allocation6], 0
    %12 = vsyncpa [#allocation4], 0
    // Predicated region
    $region2: #{projector_forward.1} parent=1 // pred_check
      _
    $region3: #{projector_forward.1} parent=1 // pred_check_branch
      %14 = sbr.rel (0) target = $region5
    $region4: #{projector_forward.1} parent=1 // pred_region
      _
    $region5: #{projector_forward.1} parent=1 // pred_fallthru
      _
    // Predicated region
    $region6: #{projector_forward.1} parent=1 // pred_check
      _
    $region7: #{projector_forward.1} parent=1 // pred_check_branch
      %16 = sbr.rel (0) target = $region9
    $region8: #{projector_forward.1} parent=1 // pred_region
      %s18 = ssub.s32 16384, 16384
      %19 = vsyncadd [#allocation3], %s18
      %s20 = sshll.u32 [#allocation2], 4
      %s21 = int_to_ptr.vmem [resolvable:$true] %s20
      %26 = dma.hbm_to_vmem [thread:$0]  %s1, 16384, %s21, [#allocation3], 1024, 1024, 64
    $region9: #{projector_forward.1} parent=1 // pred_fallthru
      _
    // Predicated region
    $region10: #{projector_forward.1} parent=1 // pred_check
      _
    $region11: #{projector_forward.1} parent=1 // pred_check_branch
      %28 = sbr.rel (0) target = $region13
    $region12: #{projector_forward.1} parent=1 // pred_region
      _
    $region13: #{projector_forward.1} parent=1 // pred_fallthru
      _
    // Predicated region
    $region14: #{projector_forward.1} parent=1 // pred_check
      _
    $region15: #{projector_forward.1} parent=1 // pred_check_branch
      %30 = sbr.rel (0) target = $region17
    $region16: #{projector_forward.1} parent=1 // pred_region
      %s32 = ssub.s32 16384, 16384
      %33 = vsyncadd [#allocation6], %s32
      %s34 = sshll.u32 [#allocation5], 4
      %s35 = int_to_ptr.vmem [resolvable:$true] %s34
      %40 = dma.hbm_to_vmem [thread:$0]  %s3, 16384, %s35, [#allocation6], 64, 64, 4
    $region17: #{projector_forward.1} parent=1 // pred_fallthru
      _
    // Predicated region
    $region18: #{projector_forward.1} parent=1 // pred_check
      _
    $region19: #{projector_forward.1} parent=1 // pred_check_branch
      %42 = sbr.rel (0) target = $region21
    $region20: #{projector_forward.1} parent=1 // pred_region
      _
    $region21: #{projector_forward.1} parent=1 // pred_fallthru
      _
    // Predicated region
    $region22: #{projector_forward.1} parent=1 // pred_check
      _
    $region23: #{projector_forward.1} parent=1 // pred_check_branch
      %44 = sbr.rel (0) target = $region25
    $region24: #{projector_forward.1} parent=1 // pred_region
      %45 = dma.done [#allocation3], 16384
    $region25: #{projector_forward.1} parent=1 // pred_fallthru
      _
    // Predicated region
    $region26: #{projector_forward.1} parent=1 // pred_check
      _
    $region27: #{projector_forward.1} parent=1 // pred_check_branch
      %47 = sbr.rel (0) target = $region29
    $region28: #{projector_forward.1} parent=1 // pred_region
      %48 = dma.done [#allocation6], 16384
    $region29: #{projector_forward.1} parent=1 // pred_fallthru
      _
    %v50 = vld [vmem:[%s0] sm:$0xf]
    %v51 = vld [vmem:[#allocation2] sm:$0xff]
    %v52 = vld [vmem:[#allocation2 + $0x8] sm:$0xff]
    %v53 = vld [vmem:[#allocation2 + $0x10] sm:$0xff]
    %v54 = vld [vmem:[#allocation2 + $0x18] sm:$0xff]
    %v55 = vld [vmem:[#allocation2 + $0x20] sm:$0xff]
    %v56 = vld [vmem:[#allocation2 + $0x28] sm:$0xff]
    %v57 = vld [vmem:[#allocation2 + $0x30] sm:$0xff]
    %v58 = vld [vmem:[#allocation2 + $0x38] sm:$0xff]
    %v59 = vld [vmem:[#allocation2 + $0x40] sm:$0xff]
    %v60 = vld [vmem:[#allocation2 + $0x48] sm:$0xff]
    %v61 = vld [vmem:[#allocation2 + $0x50] sm:$0xff]
    %v62 = vld [vmem:[#allocation2 + $0x58] sm:$0xff]
    %v63 = vld [vmem:[#allocation2 + $0x60] sm:$0xff]
    %v64 = vld [vmem:[#allocation2 + $0x68] sm:$0xff]
    %v65 = vld [vmem:[#allocation2 + $0x70] sm:$0xff]
    %v66 = vld [vmem:[#allocation2 + $0x78] sm:$0xff]
    %v67 = vld [vmem:[#allocation2 + $0x80] sm:$0xff]
    %v68 = vld [vmem:[#allocation2 + $0x88] sm:$0xff]
    %v69 = vld [vmem:[#allocation2 + $0x90] sm:$0xff]
    %v70 = vld [vmem:[#allocation2 + $0x98] sm:$0xff]
    %v71 = vld [vmem:[#allocation2 + $0xa0] sm:$0xff]
    %v72 = vld [vmem:[#allocation2 + $0xa8] sm:$0xff]
    %v73 = vld [vmem:[#allocation2 + $0xb0] sm:$0xff]
    %v74 = vld [vmem:[#allocation2 + $0xb8] sm:$0xff]
    %v75 = vld [vmem:[#allocation2 + $0xc0] sm:$0xff]
    %v76 = vld [vmem:[#allocation2 + $0xc8] sm:$0xff]
    %v77 = vld [vmem:[#allocation2 + $0xd0] sm:$0xff]
    %v78 = vld [vmem:[#allocation2 + $0xd8] sm:$0xff]
    %v79 = vld [vmem:[#allocation2 + $0xe0] sm:$0xff]
    %v80 = vld [vmem:[#allocation2 + $0xe8] sm:$0xff]
    %v81 = vld [vmem:[#allocation2 + $0xf0] sm:$0xff]
    %v82 = vld [vmem:[#allocation2 + $0xf8] sm:$0xff]
    %v83 = vld [vmem:[#allocation2 + $0x100] sm:$0xff]
    %v84 = vld [vmem:[#allocation2 + $0x108] sm:$0xff]
    %v85 = vld [vmem:[#allocation2 + $0x110] sm:$0xff]
    %v86 = vld [vmem:[#allocation2 + $0x118] sm:$0xff]
    %v87 = vld [vmem:[#allocation2 + $0x120] sm:$0xff]
    %v88 = vld [vmem:[#allocation2 + $0x128] sm:$0xff]
    %v89 = vld [vmem:[#allocation2 + $0x130] sm:$0xff]
    %v90 = vld [vmem:[#allocation2 + $0x138] sm:$0xff]
    %v91 = vld [vmem:[#allocation2 + $0x140] sm:$0xff]
    %v92 = vld [vmem:[#allocation2 + $0x148] sm:$0xff]
    %v93 = vld [vmem:[#allocation2 + $0x150] sm:$0xff]
    %v94 = vld [vmem:[#allocation2 + $0x158] sm:$0xff]
    %v95 = vld [vmem:[#allocation2 + $0x160] sm:$0xff]
    %v96 = vld [vmem:[#allocation2 + $0x168] sm:$0xff]
    %v97 = vld [vmem:[#allocation2 + $0x170] sm:$0xff]
    %v98 = vld [vmem:[#allocation2 + $0x178] sm:$0xff]
    %v99 = vld [vmem:[#allocation2 + $0x180] sm:$0xff]
    %v100 = vld [vmem:[#allocation2 + $0x188] sm:$0xff]
    %v101 = vld [vmem:[#allocation2 + $0x190] sm:$0xff]
    %v102 = vld [vmem:[#allocation2 + $0x198] sm:$0xff]
    %v103 = vld [vmem:[#allocation2 + $0x1a0] sm:$0xff]
    %v104 = vld [vmem:[#allocation2 + $0x1a8] sm:$0xff]
    %v105 = vld [vmem:[#allocation2 + $0x1b0] sm:$0xff]
    %v106 = vld [vmem:[#allocation2 + $0x1b8] sm:$0xff]
    %v107 = vld [vmem:[#allocation2 + $0x1c0] sm:$0xff]
    %v108 = vld [vmem:[#allocation2 + $0x1c8] sm:$0xff]
    %v109 = vld [vmem:[#allocation2 + $0x1d0] sm:$0xff]
    %v110 = vld [vmem:[#allocation2 + $0x1d8] sm:$0xff]
    %v111 = vld [vmem:[#allocation2 + $0x1e0] sm:$0xff]
    %v112 = vld [vmem:[#allocation2 + $0x1e8] sm:$0xff]
    %v113 = vld [vmem:[#allocation2 + $0x1f0] sm:$0xff]
    %v114 = vld [vmem:[#allocation2 + $0x1f8] sm:$0xff]
    %v115 = vld [vmem:[#allocation2 + $0x200] sm:$0xff]
    %v116 = vld [vmem:[#allocation2 + $0x208] sm:$0xff]
    %v117 = vld [vmem:[#allocation2 + $0x210] sm:$0xff]
    %v118 = vld [vmem:[#allocation2 + $0x218] sm:$0xff]
    %v119 = vld [vmem:[#allocation2 + $0x220] sm:$0xff]
    %v120 = vld [vmem:[#allocation2 + $0x228] sm:$0xff]
    %v121 = vld [vmem:[#allocation2 + $0x230] sm:$0xff]
    %v122 = vld [vmem:[#allocation2 + $0x238] sm:$0xff]
    %v123 = vld [vmem:[#allocation2 + $0x240] sm:$0xff]
    %v124 = vld [vmem:[#allocation2 + $0x248] sm:$0xff]
    %v125 = vld [vmem:[#allocation2 + $0x250] sm:$0xff]
    %v126 = vld [vmem:[#allocation2 + $0x258] sm:$0xff]
    %v127 = vld [vmem:[#allocation2 + $0x260] sm:$0xff]
    %v128 = vld [vmem:[#allocation2 + $0x268] sm:$0xff]
    %v129 = vld [vmem:[#allocation2 + $0x270] sm:$0xff]
    %v130 = vld [vmem:[#allocation2 + $0x278] sm:$0xff]
    %v131 = vld [vmem:[#allocation2 + $0x280] sm:$0xff]
    %v132 = vld [vmem:[#allocation2 + $0x288] sm:$0xff]
    %v133 = vld [vmem:[#allocation2 + $0x290] sm:$0xff]
    %v134 = vld [vmem:[#allocation2 + $0x298] sm:$0xff]
    %v135 = vld [vmem:[#allocation2 + $0x2a0] sm:$0xff]
    %v136 = vld [vmem:[#allocation2 + $0x2a8] sm:$0xff]
    %v137 = vld [vmem:[#allocation2 + $0x2b0] sm:$0xff]
    %v138 = vld [vmem:[#allocation2 + $0x2b8] sm:$0xff]
    %v139 = vld [vmem:[#allocation2 + $0x2c0] sm:$0xff]
    %v140 = vld [vmem:[#allocation2 + $0x2c8] sm:$0xff]
    %v141 = vld [vmem:[#allocation2 + $0x2d0] sm:$0xff]
    %v142 = vld [vmem:[#allocation2 + $0x2d8] sm:$0xff]
    %v143 = vld [vmem:[#allocation2 + $0x2e0] sm:$0xff]
    %v144 = vld [vmem:[#allocation2 + $0x2e8] sm:$0xff]
    %v145 = vld [vmem:[#allocation2 + $0x2f0] sm:$0xff]
    %v146 = vld [vmem:[#allocation2 + $0x2f8] sm:$0xff]
    %v147 = vld [vmem:[#allocation2 + $0x300] sm:$0xff]
    %v148 = vld [vmem:[#allocation2 + $0x308] sm:$0xff]
    %v149 = vld [vmem:[#allocation2 + $0x310] sm:$0xff]
    %v150 = vld [vmem:[#allocation2 + $0x318] sm:$0xff]
    %v151 = vld [vmem:[#allocation2 + $0x320] sm:$0xff]
    %v152 = vld [vmem:[#allocation2 + $0x328] sm:$0xff]
    %v153 = vld [vmem:[#allocation2 + $0x330] sm:$0xff]
    %v154 = vld [vmem:[#allocation2 + $0x338] sm:$0xff]
    %v155 = vld [vmem:[#allocation2 + $0x340] sm:$0xff]
    %v156 = vld [vmem:[#allocation2 + $0x348] sm:$0xff]
    %v157 = vld [vmem:[#allocation2 + $0x350] sm:$0xff]
    %v158 = vld [vmem:[#allocation2 + $0x358] sm:$0xff]
    %v159 = vld [vmem:[#allocation2 + $0x360] sm:$0xff]
    %v160 = vld [vmem:[#allocation2 + $0x368] sm:$0xff]
    %v161 = vld [vmem:[#allocation2 + $0x370] sm:$0xff]
    %v162 = vld [vmem:[#allocation2 + $0x378] sm:$0xff]
    %v163 = vld [vmem:[#allocation2 + $0x380] sm:$0xff]
    %v164 = vld [vmem:[#allocation2 + $0x388] sm:$0xff]
    %v165 = vld [vmem:[#allocation2 + $0x390] sm:$0xff]
    %v166 = vld [vmem:[#allocation2 + $0x398] sm:$0xff]
    %v167 = vld [vmem:[#allocation2 + $0x3a0] sm:$0xff]
    %v168 = vld [vmem:[#allocation2 + $0x3a8] sm:$0xff]
    %v169 = vld [vmem:[#allocation2 + $0x3b0] sm:$0xff]
    %v170 = vld [vmem:[#allocation2 + $0x3b8] sm:$0xff]
    %v171 = vld [vmem:[#allocation2 + $0x3c0] sm:$0xff]
    %v172 = vld [vmem:[#allocation2 + $0x3c8] sm:$0xff]
    %v173 = vld [vmem:[#allocation2 + $0x3d0] sm:$0xff]
    %v174 = vld [vmem:[#allocation2 + $0x3d8] sm:$0xff]
    %v175 = vld [vmem:[#allocation2 + $0x3e0] sm:$0xff]
    %v176 = vld [vmem:[#allocation2 + $0x3e8] sm:$0xff]
    %v177 = vld [vmem:[#allocation2 + $0x3f0] sm:$0xff]
    %v178 = vld [vmem:[#allocation2 + $0x3f8] sm:$0xff]
    %v307 = vunpack.c.l.b16 %v51
    %v308 = vunpack.c.h.b16 %v51
    %v309 = vunpack.c.l.b16 %v52
    %v310 = vunpack.c.h.b16 %v52
    %v311 = vunpack.c.l.b16 %v53
    %v312 = vunpack.c.h.b16 %v53
    %v313 = vunpack.c.l.b16 %v54
    %v314 = vunpack.c.h.b16 %v54
    %v315 = vunpack.c.l.b16 %v55
    %v316 = vunpack.c.h.b16 %v55
    %v317 = vunpack.c.l.b16 %v56
    %v318 = vunpack.c.h.b16 %v56
    %v319 = vunpack.c.l.b16 %v57
    %v320 = vunpack.c.h.b16 %v57
    %v321 = vunpack.c.l.b16 %v58
    %v322 = vunpack.c.h.b16 %v58
    %v323 = vunpack.c.l.b16 %v59
    %v324 = vunpack.c.h.b16 %v59
    %v325 = vunpack.c.l.b16 %v60
    %v326 = vunpack.c.h.b16 %v60
    %v327 = vunpack.c.l.b16 %v61
    %v328 = vunpack.c.h.b16 %v61
    %v329 = vunpack.c.l.b16 %v62
    %v330 = vunpack.c.h.b16 %v62
    %v331 = vunpack.c.l.b16 %v63
    %v332 = vunpack.c.h.b16 %v63
    %v333 = vunpack.c.l.b16 %v64
    %v334 = vunpack.c.h.b16 %v64
    %v335 = vunpack.c.l.b16 %v65
    %v336 = vunpack.c.h.b16 %v65
    %v337 = vunpack.c.l.b16 %v66
    %v338 = vunpack.c.h.b16 %v66
    %v339 = vunpack.c.l.b16 %v67
    %v340 = vunpack.c.h.b16 %v67
    %v341 = vunpack.c.l.b16 %v68
    %v342 = vunpack.c.h.b16 %v68
    %v343 = vunpack.c.l.b16 %v69
    %v344 = vunpack.c.h.b16 %v69
    %v345 = vunpack.c.l.b16 %v70
    %v346 = vunpack.c.h.b16 %v70
    %v347 = vunpack.c.l.b16 %v71
    %v348 = vunpack.c.h.b16 %v71
    %v349 = vunpack.c.l.b16 %v72
    %v350 = vunpack.c.h.b16 %v72
    %v351 = vunpack.c.l.b16 %v73
    %v352 = vunpack.c.h.b16 %v73
    %v353 = vunpack.c.l.b16 %v74
    %v354 = vunpack.c.h.b16 %v74
    %v355 = vunpack.c.l.b16 %v75
    %v356 = vunpack.c.h.b16 %v75
    %v357 = vunpack.c.l.b16 %v76
    %v358 = vunpack.c.h.b16 %v76
    %v359 = vunpack.c.l.b16 %v77
    %v360 = vunpack.c.h.b16 %v77
    %v361 = vunpack.c.l.b16 %v78
    %v362 = vunpack.c.h.b16 %v78
    %v363 = vunpack.c.l.b16 %v79
    %v364 = vunpack.c.h.b16 %v79
    %v365 = vunpack.c.l.b16 %v80
    %v366 = vunpack.c.h.b16 %v80
    %v367 = vunpack.c.l.b16 %v81
    %v368 = vunpack.c.h.b16 %v81
    %v369 = vunpack.c.l.b16 %v82
    %v370 = vunpack.c.h.b16 %v82
    %v371 = vunpack.c.l.b16 %v83
    %v372 = vunpack.c.h.b16 %v83
    %v373 = vunpack.c.l.b16 %v84
    %v374 = vunpack.c.h.b16 %v84
    %v375 = vunpack.c.l.b16 %v85
    %v376 = vunpack.c.h.b16 %v85
    %v377 = vunpack.c.l.b16 %v86
    %v378 = vunpack.c.h.b16 %v86
    %v379 = vunpack.c.l.b16 %v87
    %v380 = vunpack.c.h.b16 %v87
    %v381 = vunpack.c.l.b16 %v88
    %v382 = vunpack.c.h.b16 %v88
    %v383 = vunpack.c.l.b16 %v89
    %v384 = vunpack.c.h.b16 %v89
    %v385 = vunpack.c.l.b16 %v90
    %v386 = vunpack.c.h.b16 %v90
    %v387 = vunpack.c.l.b16 %v91
    %v388 = vunpack.c.h.b16 %v91
    %v389 = vunpack.c.l.b16 %v92
    %v390 = vunpack.c.h.b16 %v92
    %v391 = vunpack.c.l.b16 %v93
    %v392 = vunpack.c.h.b16 %v93
    %v393 = vunpack.c.l.b16 %v94
    %v394 = vunpack.c.h.b16 %v94
    %v395 = vunpack.c.l.b16 %v95
    %v396 = vunpack.c.h.b16 %v95
    %v397 = vunpack.c.l.b16 %v96
    %v398 = vunpack.c.h.b16 %v96
    %v399 = vunpack.c.l.b16 %v97
    %v400 = vunpack.c.h.b16 %v97
    %v401 = vunpack.c.l.b16 %v98
    %v402 = vunpack.c.h.b16 %v98
    %v403 = vunpack.c.l.b16 %v99
    %v404 = vunpack.c.h.b16 %v99
    %v405 = vunpack.c.l.b16 %v100
    %v406 = vunpack.c.h.b16 %v100
    %v407 = vunpack.c.l.b16 %v101
    %v408 = vunpack.c.h.b16 %v101
    %v409 = vunpack.c.l.b16 %v102
    %v410 = vunpack.c.h.b16 %v102
    %v411 = vunpack.c.l.b16 %v103
    %v412 = vunpack.c.h.b16 %v103
    %v413 = vunpack.c.l.b16 %v104
    %v414 = vunpack.c.h.b16 %v104
    %v415 = vunpack.c.l.b16 %v105
    %v416 = vunpack.c.h.b16 %v105
    %v417 = vunpack.c.l.b16 %v106
    %v418 = vunpack.c.h.b16 %v106
    %v419 = vunpack.c.l.b16 %v107
    %v420 = vunpack.c.h.b16 %v107
    %v421 = vunpack.c.l.b16 %v108
    %v422 = vunpack.c.h.b16 %v108
    %v423 = vunpack.c.l.b16 %v109
    %v424 = vunpack.c.h.b16 %v109
    %v425 = vunpack.c.l.b16 %v110
    %v426 = vunpack.c.h.b16 %v110
    %v427 = vunpack.c.l.b16 %v111
    %v428 = vunpack.c.h.b16 %v111
    %v429 = vunpack.c.l.b16 %v112
    %v430 = vunpack.c.h.b16 %v112
    %v431 = vunpack.c.l.b16 %v113
    %v432 = vunpack.c.h.b16 %v113
    %v433 = vunpack.c.l.b16 %v114
    %v434 = vunpack.c.h.b16 %v114
    %v435 = vunpack.c.l.b16 %v115
    %v436 = vunpack.c.h.b16 %v115
    %v437 = vunpack.c.l.b16 %v116
    %v438 = vunpack.c.h.b16 %v116
    %v439 = vunpack.c.l.b16 %v117
    %v440 = vunpack.c.h.b16 %v117
    %v441 = vunpack.c.l.b16 %v118
    %v442 = vunpack.c.h.b16 %v118
    %v443 = vunpack.c.l.b16 %v119
    %v444 = vunpack.c.h.b16 %v119
    %v445 = vunpack.c.l.b16 %v120
    %v446 = vunpack.c.h.b16 %v120
    %v447 = vunpack.c.l.b16 %v121
    %v448 = vunpack.c.h.b16 %v121
    %v449 = vunpack.c.l.b16 %v122
    %v450 = vunpack.c.h.b16 %v122
    %v451 = vunpack.c.l.b16 %v123
    %v452 = vunpack.c.h.b16 %v123
    %v453 = vunpack.c.l.b16 %v124
    %v454 = vunpack.c.h.b16 %v124
    %v455 = vunpack.c.l.b16 %v125
    %v456 = vunpack.c.h.b16 %v125
    %v457 = vunpack.c.l.b16 %v126
    %v458 = vunpack.c.h.b16 %v126
    %v459 = vunpack.c.l.b16 %v127
    %v460 = vunpack.c.h.b16 %v127
    %v461 = vunpack.c.l.b16 %v128
    %v462 = vunpack.c.h.b16 %v128
    %v463 = vunpack.c.l.b16 %v129
    %v464 = vunpack.c.h.b16 %v129
    %v465 = vunpack.c.l.b16 %v130
    %v466 = vunpack.c.h.b16 %v130
    %v467 = vunpack.c.l.b16 %v131
    %v468 = vunpack.c.h.b16 %v131
    %v469 = vunpack.c.l.b16 %v132
    %v470 = vunpack.c.h.b16 %v132
    %v471 = vunpack.c.l.b16 %v133
    %v472 = vunpack.c.h.b16 %v133
    %v473 = vunpack.c.l.b16 %v134
    %v474 = vunpack.c.h.b16 %v134
    %v475 = vunpack.c.l.b16 %v135
    %v476 = vunpack.c.h.b16 %v135
    %v477 = vunpack.c.l.b16 %v136
    %v478 = vunpack.c.h.b16 %v136
    %v479 = vunpack.c.l.b16 %v137
    %v480 = vunpack.c.h.b16 %v137
    %v481 = vunpack.c.l.b16 %v138
    %v482 = vunpack.c.h.b16 %v138
    %v483 = vunpack.c.l.b16 %v139
    %v484 = vunpack.c.h.b16 %v139
    %v485 = vunpack.c.l.b16 %v140
    %v486 = vunpack.c.h.b16 %v140
    %v487 = vunpack.c.l.b16 %v141
    %v488 = vunpack.c.h.b16 %v141
    %v489 = vunpack.c.l.b16 %v142
    %v490 = vunpack.c.h.b16 %v142
    %v491 = vunpack.c.l.b16 %v143
    %v492 = vunpack.c.h.b16 %v143
    %v493 = vunpack.c.l.b16 %v144
    %v494 = vunpack.c.h.b16 %v144
    %v495 = vunpack.c.l.b16 %v145
    %v496 = vunpack.c.h.b16 %v145
    %v497 = vunpack.c.l.b16 %v146
    %v498 = vunpack.c.h.b16 %v146
    %v499 = vunpack.c.l.b16 %v147
    %v500 = vunpack.c.h.b16 %v147
    %v501 = vunpack.c.l.b16 %v148
    %v502 = vunpack.c.h.b16 %v148
    %v503 = vunpack.c.l.b16 %v149
    %v504 = vunpack.c.h.b16 %v149
    %v505 = vunpack.c.l.b16 %v150
    %v506 = vunpack.c.h.b16 %v150
    %v507 = vunpack.c.l.b16 %v151
    %v508 = vunpack.c.h.b16 %v151
    %v509 = vunpack.c.l.b16 %v152
    %v510 = vunpack.c.h.b16 %v152
    %v511 = vunpack.c.l.b16 %v153
    %v512 = vunpack.c.h.b16 %v153
    %v513 = vunpack.c.l.b16 %v154
    %v514 = vunpack.c.h.b16 %v154
    %v515 = vunpack.c.l.b16 %v155
    %v516 = vunpack.c.h.b16 %v155
    %v517 = vunpack.c.l.b16 %v156
    %v518 = vunpack.c.h.b16 %v156
    %v519 = vunpack.c.l.b16 %v157
    %v520 = vunpack.c.h.b16 %v157
    %v521 = vunpack.c.l.b16 %v158
    %v522 = vunpack.c.h.b16 %v158
    %v523 = vunpack.c.l.b16 %v159
    %v524 = vunpack.c.h.b16 %v159
    %v525 = vunpack.c.l.b16 %v160
    %v526 = vunpack.c.h.b16 %v160
    %v527 = vunpack.c.l.b16 %v161
    %v528 = vunpack.c.h.b16 %v161
    %v529 = vunpack.c.l.b16 %v162
    %v530 = vunpack.c.h.b16 %v162
    %v531 = vunpack.c.l.b16 %v163
    %v532 = vunpack.c.h.b16 %v163
    %v533 = vunpack.c.l.b16 %v164
    %v534 = vunpack.c.h.b16 %v164
    %v535 = vunpack.c.l.b16 %v165
    %v536 = vunpack.c.h.b16 %v165
    %v537 = vunpack.c.l.b16 %v166
    %v538 = vunpack.c.h.b16 %v166
    %v539 = vunpack.c.l.b16 %v167
    %v540 = vunpack.c.h.b16 %v167
    %v541 = vunpack.c.l.b16 %v168
    %v542 = vunpack.c.h.b16 %v168
    %v543 = vunpack.c.l.b16 %v169
    %v544 = vunpack.c.h.b16 %v169
    %v545 = vunpack.c.l.b16 %v170
    %v546 = vunpack.c.h.b16 %v170
    %v547 = vunpack.c.l.b16 %v171
    %v548 = vunpack.c.h.b16 %v171
    %v549 = vunpack.c.l.b16 %v172
    %v550 = vunpack.c.h.b16 %v172
    %v551 = vunpack.c.l.b16 %v173
    %v552 = vunpack.c.h.b16 %v173
    %v553 = vunpack.c.l.b16 %v174
    %v554 = vunpack.c.h.b16 %v174
    %v555 = vunpack.c.l.b16 %v175
    %v556 = vunpack.c.h.b16 %v175
    %v557 = vunpack.c.l.b16 %v176
    %v558 = vunpack.c.h.b16 %v176
    %v559 = vunpack.c.l.b16 %v177
    %v560 = vunpack.c.h.b16 %v177
    %v561 = vunpack.c.l.b16 %v178
    %v562 = vunpack.c.h.b16 %v178
    %v563 = vpack.c.b16 %v323, %v307
    %v564 = vpack.c.b16 %v324, %v308
    %v565 = vpack.c.b16 %v325, %v309
    %v566 = vpack.c.b16 %v326, %v310
    %v567 = vpack.c.b16 %v327, %v311
    %v568 = vpack.c.b16 %v328, %v312
    %v569 = vpack.c.b16 %v329, %v313
    %v570 = vpack.c.b16 %v330, %v314
    %v571 = vpack.c.b16 %v331, %v315
    %v572 = vpack.c.b16 %v332, %v316
    %v573 = vpack.c.b16 %v333, %v317
    %v574 = vpack.c.b16 %v334, %v318
    %v575 = vpack.c.b16 %v335, %v319
    %v576 = vpack.c.b16 %v336, %v320
    %v577 = vpack.c.b16 %v337, %v321
    %v578 = vpack.c.b16 %v338, %v322
    %v579 = vpack.c.b16 %v355, %v339
    %v580 = vpack.c.b16 %v356, %v340
    %v581 = vpack.c.b16 %v357, %v341
    %v582 = vpack.c.b16 %v358, %v342
    %v583 = vpack.c.b16 %v359, %v343
    %v584 = vpack.c.b16 %v360, %v344
    %v585 = vpack.c.b16 %v361, %v345
    %v586 = vpack.c.b16 %v362, %v346
    %v587 = vpack.c.b16 %v363, %v347
    %v588 = vpack.c.b16 %v364, %v348
    %v589 = vpack.c.b16 %v365, %v349
    %v590 = vpack.c.b16 %v366, %v350
    %v591 = vpack.c.b16 %v367, %v351
    %v592 = vpack.c.b16 %v368, %v352
    %v593 = vpack.c.b16 %v369, %v353
    %v594 = vpack.c.b16 %v370, %v354
    %v595 = vpack.c.b16 %v387, %v371
    %v596 = vpack.c.b16 %v388, %v372
    %v597 = vpack.c.b16 %v389, %v373
    %v598 = vpack.c.b16 %v390, %v374
    %v599 = vpack.c.b16 %v391, %v375
    %v600 = vpack.c.b16 %v392, %v376
    %v601 = vpack.c.b16 %v393, %v377
    %v602 = vpack.c.b16 %v394, %v378
    %v603 = vpack.c.b16 %v395, %v379
    %v604 = vpack.c.b16 %v396, %v380
    %v605 = vpack.c.b16 %v397, %v381
    %v606 = vpack.c.b16 %v398, %v382
    %v607 = vpack.c.b16 %v399, %v383
    %v608 = vpack.c.b16 %v400, %v384
    %v609 = vpack.c.b16 %v401, %v385
    %v610 = vpack.c.b16 %v402, %v386
    %v611 = vpack.c.b16 %v419, %v403
    %v612 = vpack.c.b16 %v420, %v404
    %v613 = vpack.c.b16 %v421, %v405
    %v614 = vpack.c.b16 %v422, %v406
    %v615 = vpack.c.b16 %v423, %v407
    %v616 = vpack.c.b16 %v424, %v408
    %v617 = vpack.c.b16 %v425, %v409
    %v618 = vpack.c.b16 %v426, %v410
    %v619 = vpack.c.b16 %v427, %v411
    %v620 = vpack.c.b16 %v428, %v412
    %v621 = vpack.c.b16 %v429, %v413
    %v622 = vpack.c.b16 %v430, %v414
    %v623 = vpack.c.b16 %v431, %v415
    %v624 = vpack.c.b16 %v432, %v416
    %v625 = vpack.c.b16 %v433, %v417
    %v626 = vpack.c.b16 %v434, %v418
    %v627 = vpack.c.b16 %v451, %v435
    %v628 = vpack.c.b16 %v452, %v436
    %v629 = vpack.c.b16 %v453, %v437
    %v630 = vpack.c.b16 %v454, %v438
    %v631 = vpack.c.b16 %v455, %v439
    %v632 = vpack.c.b16 %v456, %v440
    %v633 = vpack.c.b16 %v457, %v441
    %v634 = vpack.c.b16 %v458, %v442
    %v635 = vpack.c.b16 %v459, %v443
    %v636 = vpack.c.b16 %v460, %v444
    %v637 = vpack.c.b16 %v461, %v445
    %v638 = vpack.c.b16 %v462, %v446
    %v639 = vpack.c.b16 %v463, %v447
    %v640 = vpack.c.b16 %v464, %v448
    %v641 = vpack.c.b16 %v465, %v449
    %v642 = vpack.c.b16 %v466, %v450
    %v643 = vpack.c.b16 %v483, %v467
    %v644 = vpack.c.b16 %v484, %v468
    %v645 = vpack.c.b16 %v485, %v469
    %v646 = vpack.c.b16 %v486, %v470
    %v647 = vpack.c.b16 %v487, %v471
    %v648 = vpack.c.b16 %v488, %v472
    %v649 = vpack.c.b16 %v489, %v473
    %v650 = vpack.c.b16 %v490, %v474
    %v651 = vpack.c.b16 %v491, %v475
    %v652 = vpack.c.b16 %v492, %v476
    %v653 = vpack.c.b16 %v493, %v477
    %v654 = vpack.c.b16 %v494, %v478
    %v655 = vpack.c.b16 %v495, %v479
    %v656 = vpack.c.b16 %v496, %v480
    %v657 = vpack.c.b16 %v497, %v481
    %v658 = vpack.c.b16 %v498, %v482
    %v659 = vpack.c.b16 %v515, %v499
    %v660 = vpack.c.b16 %v516, %v500
    %v661 = vpack.c.b16 %v517, %v501
    %v662 = vpack.c.b16 %v518, %v502
    %v663 = vpack.c.b16 %v519, %v503
    %v664 = vpack.c.b16 %v520, %v504
    %v665 = vpack.c.b16 %v521, %v505
    %v666 = vpack.c.b16 %v522, %v506
    %v667 = vpack.c.b16 %v523, %v507
    %v668 = vpack.c.b16 %v524, %v508
    %v669 = vpack.c.b16 %v525, %v509
    %v670 = vpack.c.b16 %v526, %v510
    %v671 = vpack.c.b16 %v527, %v511
    %v672 = vpack.c.b16 %v528, %v512
    %v673 = vpack.c.b16 %v529, %v513
    %v674 = vpack.c.b16 %v530, %v514
    %v675 = vpack.c.b16 %v547, %v531
    %v676 = vpack.c.b16 %v548, %v532
    %v677 = vpack.c.b16 %v549, %v533
    %v678 = vpack.c.b16 %v550, %v534
    %v679 = vpack.c.b16 %v551, %v535
    %v680 = vpack.c.b16 %v552, %v536
    %v681 = vpack.c.b16 %v553, %v537
    %v682 = vpack.c.b16 %v554, %v538
    %v683 = vpack.c.b16 %v555, %v539
    %v684 = vpack.c.b16 %v556, %v540
    %v685 = vpack.c.b16 %v557, %v541
    %v686 = vpack.c.b16 %v558, %v542
    %v687 = vpack.c.b16 %v559, %v543
    %v688 = vpack.c.b16 %v560, %v544
    %v689 = vpack.c.b16 %v561, %v545
    %v690 = vpack.c.b16 %v562, %v546
    %819 = vmatprep.subr.bf16.mxu0 %v564
    %820 = vmatpush1.bf16.msra.mxu0 %v563
    %821 = vmatprep.subr.bf16.mxu0 %v580
    %822 = vmatpush1.bf16.msra.mxu0 %v579
    %823 = vmatprep.subr.bf16.mxu0 %v596
    %824 = vmatpush1.bf16.msra.mxu0 %v595
    %825 = vmatprep.subr.bf16.mxu0 %v612
    %826 = vmatpush1.bf16.msra.mxu0 %v611
    %827 = vmatprep.subr.bf16.mxu0 %v628
    %828 = vmatpush1.bf16.msra.mxu0 %v627
    %829 = vmatprep.subr.bf16.mxu0 %v644
    %830 = vmatpush1.bf16.msra.mxu0 %v643
    %831 = vmatprep.subr.bf16.mxu0 %v660
    %832 = vmatpush1.bf16.msra.mxu0 %v659
    %833 = vmatprep.subr.bf16.mxu0 %v676
    %834 = vmatpush1.bf16.msra.mxu0 %v675
    %835 = vmatprep.subr.bf16.mxu0 0
    %836 = vmatpush1.bf16.msra.mxu0 0
    %837 = vmatprep.subr.bf16.mxu0 0
    %838 = vmatpush1.bf16.msra.mxu0 0
    %839 = vmatprep.subr.bf16.mxu0 0
    %840 = vmatpush1.bf16.msra.mxu0 0
    %841 = vmatprep.subr.bf16.mxu0 0
    %842 = vmatpush1.bf16.msra.mxu0 0
    %843 = vmatprep.subr.bf16.mxu0 0
    %844 = vmatpush1.bf16.msra.mxu0 0
    %845 = vmatprep.subr.bf16.mxu0 0
    %846 = vmatpush1.bf16.msra.mxu0 0
    %847 = vmatprep.subr.bf16.mxu0 0
    %848 = vmatpush1.bf16.msra.mxu0 0
    %849 = vmatprep.subr.bf16.mxu0 0
    %850 = vmatpush1.bf16.msra.mxu0 0
    %851 = vmatprep.mubr.bf16.mxu0 0
    %852 = vmatmul.mubr.bf16.gmra.mrb[0].mxu0 %v50
    %v853 = vpop.f32.mrb[0].mxu0
    %v854 = vadd.f32 0.0, %v853
    %v855 = vpop.f32.mrb[0].mxu0
    %v856 = vadd.f32 0.0, %v855
    %v857 = vpop.f32.mrb[0].mxu0
    %v858 = vpop.f32.mrb[0].mxu0
    %859 = vdwg.mxu0
    %860 = vmatprep.subr.bf16.mxu0 %v566
    %861 = vmatpush1.bf16.msra.mxu0 %v565
    %862 = vmatprep.subr.bf16.mxu0 %v582
    %863 = vmatpush1.bf16.msra.mxu0 %v581
    %864 = vmatprep.subr.bf16.mxu0 %v598
    %865 = vmatpush1.bf16.msra.mxu0 %v597
    %866 = vmatprep.subr.bf16.mxu0 %v614
    %867 = vmatpush1.bf16.msra.mxu0 %v613
    %868 = vmatprep.subr.bf16.mxu0 %v630
    %869 = vmatpush1.bf16.msra.mxu0 %v629
    %870 = vmatprep.subr.bf16.mxu0 %v646
    %871 = vmatpush1.bf16.msra.mxu0 %v645
    %872 = vmatprep.subr.bf16.mxu0 %v662
    %873 = vmatpush1.bf16.msra.mxu0 %v661
    %874 = vmatprep.subr.bf16.mxu0 %v678
    %875 = vmatpush1.bf16.msra.mxu0 %v677
    %876 = vmatprep.subr.bf16.mxu0 0
    %877 = vmatpush1.bf16.msra.mxu0 0
    %878 = vmatprep.subr.bf16.mxu0 0
    %879 = vmatpush1.bf16.msra.mxu0 0
    %880 = vmatprep.subr.bf16.mxu0 0
    %881 = vmatpush1.bf16.msra.mxu0 0
    %882 = vmatprep.subr.bf16.mxu0 0
    %883 = vmatpush1.bf16.msra.mxu0 0
    %884 = vmatprep.subr.bf16.mxu0 0
    %885 = vmatpush1.bf16.msra.mxu0 0
    %886 = vmatprep.subr.bf16.mxu0 0
    %887 = vmatpush1.bf16.msra.mxu0 0
    %888 = vmatprep.subr.bf16.mxu0 0
    %889 = vmatpush1.bf16.msra.mxu0 0
    %890 = vmatprep.subr.bf16.mxu0 0
    %891 = vmatpush1.bf16.msra.mxu0 0
    %892 = vmatprep.mubr.bf16.mxu0 0
    %893 = vmatmul.mubr.bf16.gmra.mrb[0].mxu0 %v50
    %v894 = vpop.f32.mrb[0].mxu0
    %v895 = vadd.f32 0.0, %v894
    %v896 = vpop.f32.mrb[0].mxu0
    %v897 = vadd.f32 0.0, %v896
    %v898 = vpop.f32.mrb[0].mxu0
    %v899 = vpop.f32.mrb[0].mxu0
    %900 = vdwg.mxu0
    %901 = vmatprep.subr.bf16.mxu0 %v568
    %902 = vmatpush1.bf16.msra.mxu0 %v567
    %903 = vmatprep.subr.bf16.mxu0 %v584
    %904 = vmatpush1.bf16.msra.mxu0 %v583
    %905 = vmatprep.subr.bf16.mxu0 %v600
    %906 = vmatpush1.bf16.msra.mxu0 %v599
    %907 = vmatprep.subr.bf16.mxu0 %v616
    %908 = vmatpush1.bf16.msra.mxu0 %v615
    %909 = vmatprep.subr.bf16.mxu0 %v632
    %910 = vmatpush1.bf16.msra.mxu0 %v631
    %911 = vmatprep.subr.bf16.mxu0 %v648
    %912 = vmatpush1.bf16.msra.mxu0 %v647
    %913 = vmatprep.subr.bf16.mxu0 %v664
    %914 = vmatpush1.bf16.msra.mxu0 %v663
    %915 = vmatprep.subr.bf16.mxu0 %v680
    %916 = vmatpush1.bf16.msra.mxu0 %v679
    %917 = vmatprep.subr.bf16.mxu0 0
    %918 = vmatpush1.bf16.msra.mxu0 0
    %919 = vmatprep.subr.bf16.mxu0 0
    %920 = vmatpush1.bf16.msra.mxu0 0
    %921 = vmatprep.subr.bf16.mxu0 0
    %922 = vmatpush1.bf16.msra.mxu0 0
    %923 = vmatprep.subr.bf16.mxu0 0
    %924 = vmatpush1.bf16.msra.mxu0 0
    %925 = vmatprep.subr.bf16.mxu0 0
    %926 = vmatpush1.bf16.msra.mxu0 0
    %927 = vmatprep.subr.bf16.mxu0 0
    %928 = vmatpush1.bf16.msra.mxu0 0
    %929 = vmatprep.subr.bf16.mxu0 0
    %930 = vmatpush1.bf16.msra.mxu0 0
    %931 = vmatprep.subr.bf16.mxu0 0
    %932 = vmatpush1.bf16.msra.mxu0 0
    %933 = vmatprep.mubr.bf16.mxu0 0
    %934 = vmatmul.mubr.bf16.gmra.mrb[0].mxu0 %v50
    %v935 = vpop.f32.mrb[0].mxu0
    %v936 = vadd.f32 0.0, %v935
    %v937 = vpop.f32.mrb[0].mxu0
    %v938 = vadd.f32 0.0, %v937
    %v939 = vpop.f32.mrb[0].mxu0
    %v940 = vpop.f32.mrb[0].mxu0
    %941 = vdwg.mxu0
    %942 = vmatprep.subr.bf16.mxu0 %v570
    %943 = vmatpush1.bf16.msra.mxu0 %v569
    %944 = vmatprep.subr.bf16.mxu0 %v586
    %945 = vmatpush1.bf16.msra.mxu0 %v585
    %946 = vmatprep.subr.bf16.mxu0 %v602
    %947 = vmatpush1.bf16.msra.mxu0 %v601
    %948 = vmatprep.subr.bf16.mxu0 %v618
    %949 = vmatpush1.bf16.msra.mxu0 %v617
    %950 = vmatprep.subr.bf16.mxu0 %v634
    %951 = vmatpush1.bf16.msra.mxu0 %v633
    %952 = vmatprep.subr.bf16.mxu0 %v650
    %953 = vmatpush1.bf16.msra.mxu0 %v649
    %954 = vmatprep.subr.bf16.mxu0 %v666
    %955 = vmatpush1.bf16.msra.mxu0 %v665
    %956 = vmatprep.subr.bf16.mxu0 %v682
    %957 = vmatpush1.bf16.msra.mxu0 %v681
    %958 = vmatprep.subr.bf16.mxu0 0
    %959 = vmatpush1.bf16.msra.mxu0 0
    %960 = vmatprep.subr.bf16.mxu0 0
    %961 = vmatpush1.bf16.msra.mxu0 0
    %962 = vmatprep.subr.bf16.mxu0 0
    %963 = vmatpush1.bf16.msra.mxu0 0
    %964 = vmatprep.subr.bf16.mxu0 0
    %965 = vmatpush1.bf16.msra.mxu0 0
    %966 = vmatprep.subr.bf16.mxu0 0
    %967 = vmatpush1.bf16.msra.mxu0 0
    %968 = vmatprep.subr.bf16.mxu0 0
    %969 = vmatpush1.bf16.msra.mxu0 0
    %970 = vmatprep.subr.bf16.mxu0 0
    %971 = vmatpush1.bf16.msra.mxu0 0
    %972 = vmatprep.subr.bf16.mxu0 0
    %973 = vmatpush1.bf16.msra.mxu0 0
    %974 = vmatprep.mubr.bf16.mxu0 0
    %975 = vmatmul.mubr.bf16.gmra.mrb[0].mxu0 %v50
    %v976 = vpop.f32.mrb[0].mxu0
    %v977 = vadd.f32 0.0, %v976
    %v978 = vpop.f32.mrb[0].mxu0
    %v979 = vadd.f32 0.0, %v978
    %v980 = vpop.f32.mrb[0].mxu0
    %v981 = vpop.f32.mrb[0].mxu0
    %982 = vdwg.mxu0
    %983 = vmatprep.subr.bf16.mxu0 %v572
    %984 = vmatpush1.bf16.msra.mxu0 %v571
    %985 = vmatprep.subr.bf16.mxu0 %v588
    %986 = vmatpush1.bf16.msra.mxu0 %v587
    %987 = vmatprep.subr.bf16.mxu0 %v604
    %988 = vmatpush1.bf16.msra.mxu0 %v603
    %989 = vmatprep.subr.bf16.mxu0 %v620
    %990 = vmatpush1.bf16.msra.mxu0 %v619
    %991 = vmatprep.subr.bf16.mxu0 %v636
    %992 = vmatpush1.bf16.msra.mxu0 %v635
    %993 = vmatprep.subr.bf16.mxu0 %v652
    %994 = vmatpush1.bf16.msra.mxu0 %v651
    %995 = vmatprep.subr.bf16.mxu0 %v668
    %996 = vmatpush1.bf16.msra.mxu0 %v667
    %997 = vmatprep.subr.bf16.mxu0 %v684
    %998 = vmatpush1.bf16.msra.mxu0 %v683
    %999 = vmatprep.subr.bf16.mxu0 0
    %1000 = vmatpush1.bf16.msra.mxu0 0
    %1001 = vmatprep.subr.bf16.mxu0 0
    %1002 = vmatpush1.bf16.msra.mxu0 0
    %1003 = vmatprep.subr.bf16.mxu0 0
    %1004 = vmatpush1.bf16.msra.mxu0 0
    %1005 = vmatprep.subr.bf16.mxu0 0
    %1006 = vmatpush1.bf16.msra.mxu0 0
    %1007 = vmatprep.subr.bf16.mxu0 0
    %1008 = vmatpush1.bf16.msra.mxu0 0
    %1009 = vmatprep.subr.bf16.mxu0 0
    %1010 = vmatpush1.bf16.msra.mxu0 0
    %1011 = vmatprep.subr.bf16.mxu0 0
    %1012 = vmatpush1.bf16.msra.mxu0 0
    %1013 = vmatprep.subr.bf16.mxu0 0
    %1014 = vmatpush1.bf16.msra.mxu0 0
    %1015 = vmatprep.mubr.bf16.mxu0 0
    %1016 = vmatmul.mubr.bf16.gmra.mrb[0].mxu0 %v50
    %v1017 = vpop.f32.mrb[0].mxu0
    %v1018 = vadd.f32 0.0, %v1017
    %v1019 = vpop.f32.mrb[0].mxu0
    %v1020 = vadd.f32 0.0, %v1019
    %v1021 = vpop.f32.mrb[0].mxu0
    %v1022 = vpop.f32.mrb[0].mxu0
    %1023 = vdwg.mxu0
    %1024 = vmatprep.subr.bf16.mxu0 %v574
    %1025 = vmatpush1.bf16.msra.mxu0 %v573
    %1026 = vmatprep.subr.bf16.mxu0 %v590
    %1027 = vmatpush1.bf16.msra.mxu0 %v589
    %1028 = vmatprep.subr.bf16.mxu0 %v606
    %1029 = vmatpush1.bf16.msra.mxu0 %v605
    %1030 = vmatprep.subr.bf16.mxu0 %v622
    %1031 = vmatpush1.bf16.msra.mxu0 %v621
    %1032 = vmatprep.subr.bf16.mxu0 %v638
    %1033 = vmatpush1.bf16.msra.mxu0 %v637
    %1034 = vmatprep.subr.bf16.mxu0 %v654
    %1035 = vmatpush1.bf16.msra.mxu0 %v653
    %1036 = vmatprep.subr.bf16.mxu0 %v670
    %1037 = vmatpush1.bf16.msra.mxu0 %v669
    %1038 = vmatprep.subr.bf16.mxu0 %v686
    %1039 = vmatpush1.bf16.msra.mxu0 %v685
    %1040 = vmatprep.subr.bf16.mxu0 0
    %1041 = vmatpush1.bf16.msra.mxu0 0
    %1042 = vmatprep.subr.bf16.mxu0 0
    %1043 = vmatpush1.bf16.msra.mxu0 0
    %1044 = vmatprep.subr.bf16.mxu0 0
    %1045 = vmatpush1.bf16.msra.mxu0 0
    %1046 = vmatprep.subr.bf16.mxu0 0
    %1047 = vmatpush1.bf16.msra.mxu0 0
    %1048 = vmatprep.subr.bf16.mxu0 0
    %1049 = vmatpush1.bf16.msra.mxu0 0
    %1050 = vmatprep.subr.bf16.mxu0 0
    %1051 = vmatpush1.bf16.msra.mxu0 0
    %1052 = vmatprep.subr.bf16.mxu0 0
    %1053 = vmatpush1.bf16.msra.mxu0 0
    %1054 = vmatprep.subr.bf16.mxu0 0
    %1055 = vmatpush1.bf16.msra.mxu0 0
    %1056 = vmatprep.mubr.bf16.mxu0 0
    %1057 = vmatmul.mubr.bf16.gmra.mrb[0].mxu0 %v50
    %v1058 = vpop.f32.mrb[0].mxu0
    %v1059 = vadd.f32 0.0, %v1058
    %v1060 = vpop.f32.mrb[0].mxu0
    %v1061 = vadd.f32 0.0, %v1060
    %v1062 = vpop.f32.mrb[0].mxu0
    %v1063 = vpop.f32.mrb[0].mxu0
    %1064 = vdwg.mxu0
    %1065 = vmatprep.subr.bf16.mxu0 %v576
    %1066 = vmatpush1.bf16.msra.mxu0 %v575
    %1067 = vmatprep.subr.bf16.mxu0 %v592
    %1068 = vmatpush1.bf16.msra.mxu0 %v591
    %1069 = vmatprep.subr.bf16.mxu0 %v608
    %1070 = vmatpush1.bf16.msra.mxu0 %v607
    %1071 = vmatprep.subr.bf16.mxu0 %v624
    %1072 = vmatpush1.bf16.msra.mxu0 %v623
    %1073 = vmatprep.subr.bf16.mxu0 %v640
    %1074 = vmatpush1.bf16.msra.mxu0 %v639
    %1075 = vmatprep.subr.bf16.mxu0 %v656
    %1076 = vmatpush1.bf16.msra.mxu0 %v655
    %1077 = vmatprep.subr.bf16.mxu0 %v672
    %1078 = vmatpush1.bf16.msra.mxu0 %v671
    %1079 = vmatprep.subr.bf16.mxu0 %v688
    %1080 = vmatpush1.bf16.msra.mxu0 %v687
    %1081 = vmatprep.subr.bf16.mxu0 0
    %1082 = vmatpush1.bf16.msra.mxu0 0
    %1083 = vmatprep.subr.bf16.mxu0 0
    %1084 = vmatpush1.bf16.msra.mxu0 0
    %1085 = vmatprep.subr.bf16.mxu0 0
    %1086 = vmatpush1.bf16.msra.mxu0 0
    %1087 = vmatprep.subr.bf16.mxu0 0
    %1088 = vmatpush1.bf16.msra.mxu0 0
    %1089 = vmatprep.subr.bf16.mxu0 0
    %1090 = vmatpush1.bf16.msra.mxu0 0
    %1091 = vmatprep.subr.bf16.mxu0 0
    %1092 = vmatpush1.bf16.msra.mxu0 0
    %1093 = vmatprep.subr.bf16.mxu0 0
    %1094 = vmatpush1.bf16.msra.mxu0 0
    %1095 = vmatprep.subr.bf16.mxu0 0
    %1096 = vmatpush1.bf16.msra.mxu0 0
    %1097 = vmatprep.mubr.bf16.mxu0 0
    %1098 = vmatmul.mubr.bf16.gmra.mrb[0].mxu0 %v50
    %v1099 = vpop.f32.mrb[0].mxu0
    %v1100 = vadd.f32 0.0, %v1099
    %v1101 = vpop.f32.mrb[0].mxu0
    %v1102 = vadd.f32 0.0, %v1101
    %v1103 = vpop.f32.mrb[0].mxu0
    %v1104 = vpop.f32.mrb[0].mxu0
    %1105 = vdwg.mxu0
    %1106 = vmatprep.subr.bf16.mxu0 %v578
    %1107 = vmatpush1.bf16.msra.mxu0 %v577
    %1108 = vmatprep.subr.bf16.mxu0 %v594
    %1109 = vmatpush1.bf16.msra.mxu0 %v593
    %1110 = vmatprep.subr.bf16.mxu0 %v610
    %1111 = vmatpush1.bf16.msra.mxu0 %v609
    %1112 = vmatprep.subr.bf16.mxu0 %v626
    %1113 = vmatpush1.bf16.msra.mxu0 %v625
    %1114 = vmatprep.subr.bf16.mxu0 %v642
    %1115 = vmatpush1.bf16.msra.mxu0 %v641
    %1116 = vmatprep.subr.bf16.mxu0 %v658
    %1117 = vmatpush1.bf16.msra.mxu0 %v657
    %1118 = vmatprep.subr.bf16.mxu0 %v674
    %1119 = vmatpush1.bf16.msra.mxu0 %v673
    %1120 = vmatprep.subr.bf16.mxu0 %v690
    %1121 = vmatpush1.bf16.msra.mxu0 %v689
    %1122 = vmatprep.subr.bf16.mxu0 0
    %1123 = vmatpush1.bf16.msra.mxu0 0
    %1124 = vmatprep.subr.bf16.mxu0 0
    %1125 = vmatpush1.bf16.msra.mxu0 0
    %1126 = vmatprep.subr.bf16.mxu0 0
    %1127 = vmatpush1.bf16.msra.mxu0 0
    %1128 = vmatprep.subr.bf16.mxu0 0
    %1129 = vmatpush1.bf16.msra.mxu0 0
    %1130 = vmatprep.subr.bf16.mxu0 0
    %1131 = vmatpush1.bf16.msra.mxu0 0
    %1132 = vmatprep.subr.bf16.mxu0 0
    %1133 = vmatpush1.bf16.msra.mxu0 0
    %1134 = vmatprep.subr.bf16.mxu0 0
    %1135 = vmatpush1.bf16.msra.mxu0 0
    %1136 = vmatprep.subr.bf16.mxu0 0
    %1137 = vmatpush1.bf16.msra.mxu0 0
    %1138 = vmatprep.mubr.bf16.mxu0 0
    %1139 = vmatmul.mubr.bf16.gmra.mrb[0].mxu0 %v50
    %v1140 = vpop.f32.mrb[0].mxu0
    %v1141 = vadd.f32 0.0, %v1140
    %v1142 = vpop.f32.mrb[0].mxu0
    %v1143 = vadd.f32 0.0, %v1142
    %v1144 = vpop.f32.mrb[0].mxu0
    %v1145 = vpop.f32.mrb[0].mxu0
    %1146 = vdwg.mxu0
    %v1147 = vpack.c.bf16 %v854, %v854
    %v1148 = vpack.c.bf16 %v856, %v856
    %v1149 = vpack.c.bf16 %v895, %v895
    %v1150 = vpack.c.bf16 %v897, %v897
    %v1151 = vpack.c.bf16 %v936, %v936
    %v1152 = vpack.c.bf16 %v938, %v938
    %v1153 = vpack.c.bf16 %v977, %v977
    %v1154 = vpack.c.bf16 %v979, %v979
    %v1155 = vpack.c.bf16 %v1018, %v1018
    %v1156 = vpack.c.bf16 %v1020, %v1020
    %v1157 = vpack.c.bf16 %v1059, %v1059
    %v1158 = vpack.c.bf16 %v1061, %v1061
    %v1159 = vpack.c.bf16 %v1100, %v1100
    %v1160 = vpack.c.bf16 %v1102, %v1102
    %v1161 = vpack.c.bf16 %v1141, %v1141
    %v1162 = vpack.c.bf16 %v1143, %v1143
    %v1163 = vld [vmem:[%s2] sm:$0xff]
    %v1164 = vld [vmem:[%s2 + $0x8] sm:$0xff]
    %v1167 = vcombine.high %v1163, %v1163
    %v1169 = vunpack.c.l.s4 1966171168
    %v1170 = vunpack.c.0.s8 %v1169
    %v1171 = vlaneseq
    %v1172 = vshrl.u32 %v1171, 7
    %v1173 = vsub.s32 %v1170, %v1172
    %v1174 = vrot.slane %v1163, %v1173
    %v1176 = vunpack.c.l.s4 1966171168
    %v1177 = vunpack.c.0.s8 %v1176
    %v1178 = vlaneseq
    %v1179 = vshrl.u32 %v1178, 7
    %v1180 = vsub.s32 %v1177, %v1179
    %v1181 = vrot.slane %v1167, %v1180
    %v1182 = vcombine.high %v1174, %v1174
    %v1183 = vcombine.high %v1181, %v1181
    %v1185 = vunpack.c.l.s4 1966171168
    %v1186 = vunpack.c.0.s8 %v1185
    %v1187 = vlaneseq
    %v1188 = vshrl.u32 %v1187, 7
    %v1189 = vsub.s32 %v1186, %v1188
    %v1190 = vrot.slane %v1174, %v1189
    %v1192 = vunpack.c.l.s4 1966171168
    %v1193 = vunpack.c.0.s8 %v1192
    %v1194 = vlaneseq
    %v1195 = vshrl.u32 %v1194, 7
    %v1196 = vsub.s32 %v1193, %v1195
    %v1197 = vrot.slane %v1181, %v1196
    %v1199 = vunpack.c.l.s4 1966171168
    %v1200 = vunpack.c.0.s8 %v1199
    %v1201 = vlaneseq
    %v1202 = vshrl.u32 %v1201, 7
    %v1203 = vsub.s32 %v1200, %v1202
    %v1204 = vrot.slane %v1182, %v1203
    %v1206 = vunpack.c.l.s4 1966171168
    %v1207 = vunpack.c.0.s8 %v1206
    %v1208 = vlaneseq
    %v1209 = vshrl.u32 %v1208, 7
    %v1210 = vsub.s32 %v1207, %v1209
    %v1211 = vrot.slane %v1183, %v1210
    %v1212 = vcombine.high %v1190, %v1190
    %v1213 = vcombine.high %v1197, %v1197
    %v1214 = vcombine.high %v1204, %v1204
    %v1215 = vcombine.high %v1211, %v1211
    %v1216 = vcombine.high %v1164, %v1164
    %v1218 = vunpack.c.l.s4 1966171168
    %v1219 = vunpack.c.0.s8 %v1218
    %v1220 = vlaneseq
    %v1221 = vshrl.u32 %v1220, 7
    %v1222 = vsub.s32 %v1219, %v1221
    %v1223 = vrot.slane %v1164, %v1222
    %v1225 = vunpack.c.l.s4 1966171168
    %v1226 = vunpack.c.0.s8 %v1225
    %v1227 = vlaneseq
    %v1228 = vshrl.u32 %v1227, 7
    %v1229 = vsub.s32 %v1226, %v1228
    %v1230 = vrot.slane %v1216, %v1229
    %v1231 = vcombine.high %v1223, %v1223
    %v1232 = vcombine.high %v1230, %v1230
    %v1234 = vunpack.c.l.s4 1966171168
    %v1235 = vunpack.c.0.s8 %v1234
    %v1236 = vlaneseq
    %v1237 = vshrl.u32 %v1236, 7
    %v1238 = vsub.s32 %v1235, %v1237
    %v1239 = vrot.slane %v1223, %v1238
    %v1241 = vunpack.c.l.s4 1966171168
    %v1242 = vunpack.c.0.s8 %v1241
    %v1243 = vlaneseq
    %v1244 = vshrl.u32 %v1243, 7
    %v1245 = vsub.s32 %v1242, %v1244
    %v1246 = vrot.slane %v1230, %v1245
    %v1248 = vunpack.c.l.s4 1966171168
    %v1249 = vunpack.c.0.s8 %v1248
    %v1250 = vlaneseq
    %v1251 = vshrl.u32 %v1250, 7
    %v1252 = vsub.s32 %v1249, %v1251
    %v1253 = vrot.slane %v1231, %v1252
    %v1255 = vunpack.c.l.s4 1966171168
    %v1256 = vunpack.c.0.s8 %v1255
    %v1257 = vlaneseq
    %v1258 = vshrl.u32 %v1257, 7
    %v1259 = vsub.s32 %v1256, %v1258
    %v1260 = vrot.slane %v1232, %v1259
    %v1261 = vcombine.high %v1239, %v1239
    %v1262 = vcombine.high %v1246, %v1246
    %v1263 = vcombine.high %v1253, %v1253
    %v1264 = vcombine.high %v1260, %v1260
    %v1266 = vpack.i.b16 %v1190, %v1190
    %v1268 = vlaneseq
    %v1269 = vshrl.u32 %v1268, 7
    %v1270 = vsub.s32 0, %v1269
    %v1271 = vrot.slane %v1266, %v1270
    %v1273 = vpack.i.b16 %v1204, %v1204
    %v1275 = vlaneseq
    %v1276 = vshrl.u32 %v1275, 7
    %v1277 = vsub.s32 0, %v1276
    %v1278 = vrot.slane %v1273, %v1277
    %v1280 = vpack.i.b16 %v1212, %v1212
    %v1282 = vlaneseq
    %v1283 = vshrl.u32 %v1282, 7
    %v1284 = vsub.s32 0, %v1283
    %v1285 = vrot.slane %v1280, %v1284
    %v1287 = vpack.i.b16 %v1214, %v1214
    %v1289 = vlaneseq
    %v1290 = vshrl.u32 %v1289, 7
    %v1291 = vsub.s32 0, %v1290
    %v1292 = vrot.slane %v1287, %v1291
    %v1294 = vpack.i.b16 %v1197, %v1197
    %v1296 = vlaneseq
    %v1297 = vshrl.u32 %v1296, 7
    %v1298 = vsub.s32 0, %v1297
    %v1299 = vrot.slane %v1294, %v1298
    %v1301 = vpack.i.b16 %v1211, %v1211
    %v1303 = vlaneseq
    %v1304 = vshrl.u32 %v1303, 7
    %v1305 = vsub.s32 0, %v1304
    %v1306 = vrot.slane %v1301, %v1305
    %v1308 = vpack.i.b16 %v1213, %v1213
    %v1310 = vlaneseq
    %v1311 = vshrl.u32 %v1310, 7
    %v1312 = vsub.s32 0, %v1311
    %v1313 = vrot.slane %v1308, %v1312
    %v1315 = vpack.i.b16 %v1215, %v1215
    %v1317 = vlaneseq
    %v1318 = vshrl.u32 %v1317, 7
    %v1319 = vsub.s32 0, %v1318
    %v1320 = vrot.slane %v1315, %v1319
    %v1322 = vpack.i.b16 %v1239, %v1239
    %v1324 = vlaneseq
    %v1325 = vshrl.u32 %v1324, 7
    %v1326 = vsub.s32 0, %v1325
    %v1327 = vrot.slane %v1322, %v1326
    %v1329 = vpack.i.b16 %v1253, %v1253
    %v1331 = vlaneseq
    %v1332 = vshrl.u32 %v1331, 7
    %v1333 = vsub.s32 0, %v1332
    %v1334 = vrot.slane %v1329, %v1333
    %v1336 = vpack.i.b16 %v1261, %v1261
    %v1338 = vlaneseq
    %v1339 = vshrl.u32 %v1338, 7
    %v1340 = vsub.s32 0, %v1339
    %v1341 = vrot.slane %v1336, %v1340
    %v1343 = vpack.i.b16 %v1263, %v1263
    %v1345 = vlaneseq
    %v1346 = vshrl.u32 %v1345, 7
    %v1347 = vsub.s32 0, %v1346
    %v1348 = vrot.slane %v1343, %v1347
    %v1350 = vpack.i.b16 %v1246, %v1246
    %v1352 = vlaneseq
    %v1353 = vshrl.u32 %v1352, 7
    %v1354 = vsub.s32 0, %v1353
    %v1355 = vrot.slane %v1350, %v1354
    %v1357 = vpack.i.b16 %v1260, %v1260
    %v1359 = vlaneseq
    %v1360 = vshrl.u32 %v1359, 7
    %v1361 = vsub.s32 0, %v1360
    %v1362 = vrot.slane %v1357, %v1361
    %v1364 = vpack.i.b16 %v1262, %v1262
    %v1366 = vlaneseq
    %v1367 = vshrl.u32 %v1366, 7
    %v1368 = vsub.s32 0, %v1367
    %v1369 = vrot.slane %v1364, %v1368
    %v1371 = vpack.i.b16 %v1264, %v1264
    %v1373 = vlaneseq
    %v1374 = vshrl.u32 %v1373, 7
    %v1375 = vsub.s32 0, %v1374
    %v1376 = vrot.slane %v1371, %v1375
    %v1377 = vadd.bf16 %v1147, %v1271
    %v1378 = vadd.bf16 %v1148, %v1278
    %v1379 = vadd.bf16 %v1149, %v1285
    %v1380 = vadd.bf16 %v1150, %v1292
    %v1381 = vadd.bf16 %v1151, %v1299
    %v1382 = vadd.bf16 %v1152, %v1306
    %v1383 = vadd.bf16 %v1153, %v1313
    %v1384 = vadd.bf16 %v1154, %v1320
    %v1385 = vadd.bf16 %v1155, %v1327
    %v1386 = vadd.bf16 %v1156, %v1334
    %v1387 = vadd.bf16 %v1157, %v1341
    %v1388 = vadd.bf16 %v1158, %v1348
    %v1389 = vadd.bf16 %v1159, %v1355
    %v1390 = vadd.bf16 %v1160, %v1362
    %v1391 = vadd.bf16 %v1161, %v1369
    %v1392 = vadd.bf16 %v1162, %v1376
    %v1393 = vmax.bf16 %v1377, 0
    %v1394 = vmax.bf16 %v1378, 0
    %v1395 = vmax.bf16 %v1379, 0
    %v1396 = vmax.bf16 %v1380, 0
    %v1397 = vmax.bf16 %v1381, 0
    %v1398 = vmax.bf16 %v1382, 0
    %v1399 = vmax.bf16 %v1383, 0
    %v1400 = vmax.bf16 %v1384, 0
    %v1401 = vmax.bf16 %v1385, 0
    %v1402 = vmax.bf16 %v1386, 0
    %v1403 = vmax.bf16 %v1387, 0
    %v1404 = vmax.bf16 %v1388, 0
    %v1405 = vmax.bf16 %v1389, 0
    %v1406 = vmax.bf16 %v1390, 0
    %v1407 = vmax.bf16 %v1391, 0
    %v1408 = vmax.bf16 %v1392, 0
    %v1409 = vld [vmem:[#allocation5] sm:$0xf]
    %v1410 = vld [vmem:[#allocation5 + $0x4] sm:$0xf]
    %v1411 = vld [vmem:[#allocation5 + $0x8] sm:$0xf]
    %v1412 = vld [vmem:[#allocation5 + $0xc] sm:$0xf]
    %v1413 = vld [vmem:[#allocation5 + $0x10] sm:$0xf]
    %v1414 = vld [vmem:[#allocation5 + $0x14] sm:$0xf]
    %v1415 = vld [vmem:[#allocation5 + $0x18] sm:$0xf]
    %v1416 = vld [vmem:[#allocation5 + $0x1c] sm:$0xf]
    %v1417 = vld [vmem:[#allocation5 + $0x20] sm:$0xf]
    %v1418 = vld [vmem:[#allocation5 + $0x24] sm:$0xf]
    %v1419 = vld [vmem:[#allocation5 + $0x28] sm:$0xf]
    %v1420 = vld [vmem:[#allocation5 + $0x2c] sm:$0xf]
    %v1421 = vld [vmem:[#allocation5 + $0x30] sm:$0xf]
    %v1422 = vld [vmem:[#allocation5 + $0x34] sm:$0xf]
    %v1423 = vld [vmem:[#allocation5 + $0x38] sm:$0xf]
    %v1424 = vld [vmem:[#allocation5 + $0x3c] sm:$0xf]
    %v1425 = vld [vmem:[#allocation5 + $0x40] sm:$0xf]
    %v1426 = vld [vmem:[#allocation5 + $0x44] sm:$0xf]
    %v1427 = vld [vmem:[#allocation5 + $0x48] sm:$0xf]
    %v1428 = vld [vmem:[#allocation5 + $0x4c] sm:$0xf]
    %v1429 = vld [vmem:[#allocation5 + $0x50] sm:$0xf]
    %v1430 = vld [vmem:[#allocation5 + $0x54] sm:$0xf]
    %v1431 = vld [vmem:[#allocation5 + $0x58] sm:$0xf]
    %v1432 = vld [vmem:[#allocation5 + $0x5c] sm:$0xf]
    %v1433 = vld [vmem:[#allocation5 + $0x60] sm:$0xf]
    %v1434 = vld [vmem:[#allocation5 + $0x64] sm:$0xf]
    %v1435 = vld [vmem:[#allocation5 + $0x68] sm:$0xf]
    %v1436 = vld [vmem:[#allocation5 + $0x6c] sm:$0xf]
    %v1437 = vld [vmem:[#allocation5 + $0x70] sm:$0xf]
    %v1438 = vld [vmem:[#allocation5 + $0x74] sm:$0xf]
    %v1439 = vld [vmem:[#allocation5 + $0x78] sm:$0xf]
    %v1440 = vld [vmem:[#allocation5 + $0x7c] sm:$0xf]
    %v1441 = vld [vmem:[#allocation5 + $0x80] sm:$0xf]
    %v1442 = vld [vmem:[#allocation5 + $0x84] sm:$0xf]
    %v1443 = vld [vmem:[#allocation5 + $0x88] sm:$0xf]
    %v1444 = vld [vmem:[#allocation5 + $0x8c] sm:$0xf]
    %v1445 = vld [vmem:[#allocation5 + $0x90] sm:$0xf]
    %v1446 = vld [vmem:[#allocation5 + $0x94] sm:$0xf]
    %v1447 = vld [vmem:[#allocation5 + $0x98] sm:$0xf]
    %v1448 = vld [vmem:[#allocation5 + $0x9c] sm:$0xf]
    %v1449 = vld [vmem:[#allocation5 + $0xa0] sm:$0xf]
    %v1450 = vld [vmem:[#allocation5 + $0xa4] sm:$0xf]
    %v1451 = vld [vmem:[#allocation5 + $0xa8] sm:$0xf]
    %v1452 = vld [vmem:[#allocation5 + $0xac] sm:$0xf]
    %v1453 = vld [vmem:[#allocation5 + $0xb0] sm:$0xf]
    %v1454 = vld [vmem:[#allocation5 + $0xb4] sm:$0xf]
    %v1455 = vld [vmem:[#allocation5 + $0xb8] sm:$0xf]
    %v1456 = vld [vmem:[#allocation5 + $0xbc] sm:$0xf]
    %v1457 = vld [vmem:[#allocation5 + $0xc0] sm:$0xf]
    %v1458 = vld [vmem:[#allocation5 + $0xc4] sm:$0xf]
    %v1459 = vld [vmem:[#allocation5 + $0xc8] sm:$0xf]
    %v1460 = vld [vmem:[#allocation5 + $0xcc] sm:$0xf]
    %v1461 = vld [vmem:[#allocation5 + $0xd0] sm:$0xf]
    %v1462 = vld [vmem:[#allocation5 + $0xd4] sm:$0xf]
    %v1463 = vld [vmem:[#allocation5 + $0xd8] sm:$0xf]
    %v1464 = vld [vmem:[#allocation5 + $0xdc] sm:$0xf]
    %v1465 = vld [vmem:[#allocation5 + $0xe0] sm:$0xf]
    %v1466 = vld [vmem:[#allocation5 + $0xe4] sm:$0xf]
    %v1467 = vld [vmem:[#allocation5 + $0xe8] sm:$0xf]
    %v1468 = vld [vmem:[#allocation5 + $0xec] sm:$0xf]
    %v1469 = vld [vmem:[#allocation5 + $0xf0] sm:$0xf]
    %v1470 = vld [vmem:[#allocation5 + $0xf4] sm:$0xf]
    %v1471 = vld [vmem:[#allocation5 + $0xf8] sm:$0xf]
    %v1472 = vld [vmem:[#allocation5 + $0xfc] sm:$0xf]
    %v1473 = vld [vmem:[#allocation5 + $0x100] sm:$0xf]
    %v1474 = vld [vmem:[#allocation5 + $0x104] sm:$0xf]
    %v1475 = vld [vmem:[#allocation5 + $0x108] sm:$0xf]
    %v1476 = vld [vmem:[#allocation5 + $0x10c] sm:$0xf]
    %v1477 = vld [vmem:[#allocation5 + $0x110] sm:$0xf]
    %v1478 = vld [vmem:[#allocation5 + $0x114] sm:$0xf]
    %v1479 = vld [vmem:[#allocation5 + $0x118] sm:$0xf]
    %v1480 = vld [vmem:[#allocation5 + $0x11c] sm:$0xf]
    %v1481 = vld [vmem:[#allocation5 + $0x120] sm:$0xf]
    %v1482 = vld [vmem:[#allocation5 + $0x124] sm:$0xf]
    %v1483 = vld [vmem:[#allocation5 + $0x128] sm:$0xf]
    %v1484 = vld [vmem:[#allocation5 + $0x12c] sm:$0xf]
    %v1485 = vld [vmem:[#allocation5 + $0x130] sm:$0xf]
    %v1486 = vld [vmem:[#allocation5 + $0x134] sm:$0xf]
    %v1487 = vld [vmem:[#allocation5 + $0x138] sm:$0xf]
    %v1488 = vld [vmem:[#allocation5 + $0x13c] sm:$0xf]
    %v1489 = vld [vmem:[#allocation5 + $0x140] sm:$0xf]
    %v1490 = vld [vmem:[#allocation5 + $0x144] sm:$0xf]
    %v1491 = vld [vmem:[#allocation5 + $0x148] sm:$0xf]
    %v1492 = vld [vmem:[#allocation5 + $0x14c] sm:$0xf]
    %v1493 = vld [vmem:[#allocation5 + $0x150] sm:$0xf]
    %v1494 = vld [vmem:[#allocation5 + $0x154] sm:$0xf]
    %v1495 = vld [vmem:[#allocation5 + $0x158] sm:$0xf]
    %v1496 = vld [vmem:[#allocation5 + $0x15c] sm:$0xf]
    %v1497 = vld [vmem:[#allocation5 + $0x160] sm:$0xf]
    %v1498 = vld [vmem:[#allocation5 + $0x164] sm:$0xf]
    %v1499 = vld [vmem:[#allocation5 + $0x168] sm:$0xf]
    %v1500 = vld [vmem:[#allocation5 + $0x16c] sm:$0xf]
    %v1501 = vld [vmem:[#allocation5 + $0x170] sm:$0xf]
    %v1502 = vld [vmem:[#allocation5 + $0x174] sm:$0xf]
    %v1503 = vld [vmem:[#allocation5 + $0x178] sm:$0xf]
    %v1504 = vld [vmem:[#allocation5 + $0x17c] sm:$0xf]
    %v1505 = vld [vmem:[#allocation5 + $0x180] sm:$0xf]
    %v1506 = vld [vmem:[#allocation5 + $0x184] sm:$0xf]
    %v1507 = vld [vmem:[#allocation5 + $0x188] sm:$0xf]
    %v1508 = vld [vmem:[#allocation5 + $0x18c] sm:$0xf]
    %v1509 = vld [vmem:[#allocation5 + $0x190] sm:$0xf]
    %v1510 = vld [vmem:[#allocation5 + $0x194] sm:$0xf]
    %v1511 = vld [vmem:[#allocation5 + $0x198] sm:$0xf]
    %v1512 = vld [vmem:[#allocation5 + $0x19c] sm:$0xf]
    %v1513 = vld [vmem:[#allocation5 + $0x1a0] sm:$0xf]
    %v1514 = vld [vmem:[#allocation5 + $0x1a4] sm:$0xf]
    %v1515 = vld [vmem:[#allocation5 + $0x1a8] sm:$0xf]
    %v1516 = vld [vmem:[#allocation5 + $0x1ac] sm:$0xf]
    %v1517 = vld [vmem:[#allocation5 + $0x1b0] sm:$0xf]
    %v1518 = vld [vmem:[#allocation5 + $0x1b4] sm:$0xf]
    %v1519 = vld [vmem:[#allocation5 + $0x1b8] sm:$0xf]
    %v1520 = vld [vmem:[#allocation5 + $0x1bc] sm:$0xf]
    %v1521 = vld [vmem:[#allocation5 + $0x1c0] sm:$0xf]
    %v1522 = vld [vmem:[#allocation5 + $0x1c4] sm:$0xf]
    %v1523 = vld [vmem:[#allocation5 + $0x1c8] sm:$0xf]
    %v1524 = vld [vmem:[#allocation5 + $0x1cc] sm:$0xf]
    %v1525 = vld [vmem:[#allocation5 + $0x1d0] sm:$0xf]
    %v1526 = vld [vmem:[#allocation5 + $0x1d4] sm:$0xf]
    %v1527 = vld [vmem:[#allocation5 + $0x1d8] sm:$0xf]
    %v1528 = vld [vmem:[#allocation5 + $0x1dc] sm:$0xf]
    %v1529 = vld [vmem:[#allocation5 + $0x1e0] sm:$0xf]
    %v1530 = vld [vmem:[#allocation5 + $0x1e4] sm:$0xf]
    %v1531 = vld [vmem:[#allocation5 + $0x1e8] sm:$0xf]
    %v1532 = vld [vmem:[#allocation5 + $0x1ec] sm:$0xf]
    %v1533 = vld [vmem:[#allocation5 + $0x1f0] sm:$0xf]
    %v1534 = vld [vmem:[#allocation5 + $0x1f4] sm:$0xf]
    %v1535 = vld [vmem:[#allocation5 + $0x1f8] sm:$0xf]
    %v1536 = vld [vmem:[#allocation5 + $0x1fc] sm:$0xf]
    %v1537 = vld [vmem:[#allocation5 + $0x200] sm:$0xf]
    %v1538 = vld [vmem:[#allocation5 + $0x204] sm:$0xf]
    %v1539 = vld [vmem:[#allocation5 + $0x208] sm:$0xf]
    %v1540 = vld [vmem:[#allocation5 + $0x20c] sm:$0xf]
    %v1541 = vld [vmem:[#allocation5 + $0x210] sm:$0xf]
    %v1542 = vld [vmem:[#allocation5 + $0x214] sm:$0xf]
    %v1543 = vld [vmem:[#allocation5 + $0x218] sm:$0xf]
    %v1544 = vld [vmem:[#allocation5 + $0x21c] sm:$0xf]
    %v1545 = vld [vmem:[#allocation5 + $0x220] sm:$0xf]
    %v1546 = vld [vmem:[#allocation5 + $0x224] sm:$0xf]
    %v1547 = vld [vmem:[#allocation5 + $0x228] sm:$0xf]
    %v1548 = vld [vmem:[#allocation5 + $0x22c] sm:$0xf]
    %v1549 = vld [vmem:[#allocation5 + $0x230] sm:$0xf]
    %v1550 = vld [vmem:[#allocation5 + $0x234] sm:$0xf]
    %v1551 = vld [vmem:[#allocation5 + $0x238] sm:$0xf]
    %v1552 = vld [vmem:[#allocation5 + $0x23c] sm:$0xf]
    %v1553 = vld [vmem:[#allocation5 + $0x240] sm:$0xf]
    %v1554 = vld [vmem:[#allocation5 + $0x244] sm:$0xf]
    %v1555 = vld [vmem:[#allocation5 + $0x248] sm:$0xf]
    %v1556 = vld [vmem:[#allocation5 + $0x24c] sm:$0xf]
    %v1557 = vld [vmem:[#allocation5 + $0x250] sm:$0xf]
    %v1558 = vld [vmem:[#allocation5 + $0x254] sm:$0xf]
    %v1559 = vld [vmem:[#allocation5 + $0x258] sm:$0xf]
    %v1560 = vld [vmem:[#allocation5 + $0x25c] sm:$0xf]
    %v1561 = vld [vmem:[#allocation5 + $0x260] sm:$0xf]
    %v1562 = vld [vmem:[#allocation5 + $0x264] sm:$0xf]
    %v1563 = vld [vmem:[#allocation5 + $0x268] sm:$0xf]
    %v1564 = vld [vmem:[#allocation5 + $0x26c] sm:$0xf]
    %v1565 = vld [vmem:[#allocation5 + $0x270] sm:$0xf]
    %v1566 = vld [vmem:[#allocation5 + $0x274] sm:$0xf]
    %v1567 = vld [vmem:[#allocation5 + $0x278] sm:$0xf]
    %v1568 = vld [vmem:[#allocation5 + $0x27c] sm:$0xf]
    %v1569 = vld [vmem:[#allocation5 + $0x280] sm:$0xf]
    %v1570 = vld [vmem:[#allocation5 + $0x284] sm:$0xf]
    %v1571 = vld [vmem:[#allocation5 + $0x288] sm:$0xf]
    %v1572 = vld [vmem:[#allocation5 + $0x28c] sm:$0xf]
    %v1573 = vld [vmem:[#allocation5 + $0x290] sm:$0xf]
    %v1574 = vld [vmem:[#allocation5 + $0x294] sm:$0xf]
    %v1575 = vld [vmem:[#allocation5 + $0x298] sm:$0xf]
    %v1576 = vld [vmem:[#allocation5 + $0x29c] sm:$0xf]
    %v1577 = vld [vmem:[#allocation5 + $0x2a0] sm:$0xf]
    %v1578 = vld [vmem:[#allocation5 + $0x2a4] sm:$0xf]
    %v1579 = vld [vmem:[#allocation5 + $0x2a8] sm:$0xf]
    %v1580 = vld [vmem:[#allocation5 + $0x2ac] sm:$0xf]
    %v1581 = vld [vmem:[#allocation5 + $0x2b0] sm:$0xf]
    %v1582 = vld [vmem:[#allocation5 + $0x2b4] sm:$0xf]
    %v1583 = vld [vmem:[#allocation5 + $0x2b8] sm:$0xf]
    %v1584 = vld [vmem:[#allocation5 + $0x2bc] sm:$0xf]
    %v1585 = vld [vmem:[#allocation5 + $0x2c0] sm:$0xf]
    %v1586 = vld [vmem:[#allocation5 + $0x2c4] sm:$0xf]
    %v1587 = vld [vmem:[#allocation5 + $0x2c8] sm:$0xf]
    %v1588 = vld [vmem:[#allocation5 + $0x2cc] sm:$0xf]
    %v1589 = vld [vmem:[#allocation5 + $0x2d0] sm:$0xf]
    %v1590 = vld [vmem:[#allocation5 + $0x2d4] sm:$0xf]
    %v1591 = vld [vmem:[#allocation5 + $0x2d8] sm:$0xf]
    %v1592 = vld [vmem:[#allocation5 + $0x2dc] sm:$0xf]
    %v1593 = vld [vmem:[#allocation5 + $0x2e0] sm:$0xf]
    %v1594 = vld [vmem:[#allocation5 + $0x2e4] sm:$0xf]
    %v1595 = vld [vmem:[#allocation5 + $0x2e8] sm:$0xf]
    %v1596 = vld [vmem:[#allocation5 + $0x2ec] sm:$0xf]
    %v1597 = vld [vmem:[#allocation5 + $0x2f0] sm:$0xf]
    %v1598 = vld [vmem:[#allocation5 + $0x2f4] sm:$0xf]
    %v1599 = vld [vmem:[#allocation5 + $0x2f8] sm:$0xf]
    %v1600 = vld [vmem:[#allocation5 + $0x2fc] sm:$0xf]
    %v1601 = vld [vmem:[#allocation5 + $0x300] sm:$0xf]
    %v1602 = vld [vmem:[#allocation5 + $0x304] sm:$0xf]
    %v1603 = vld [vmem:[#allocation5 + $0x308] sm:$0xf]
    %v1604 = vld [vmem:[#allocation5 + $0x30c] sm:$0xf]
    %v1605 = vld [vmem:[#allocation5 + $0x310] sm:$0xf]
    %v1606 = vld [vmem:[#allocation5 + $0x314] sm:$0xf]
    %v1607 = vld [vmem:[#allocation5 + $0x318] sm:$0xf]
    %v1608 = vld [vmem:[#allocation5 + $0x31c] sm:$0xf]
    %v1609 = vld [vmem:[#allocation5 + $0x320] sm:$0xf]
    %v1610 = vld [vmem:[#allocation5 + $0x324] sm:$0xf]
    %v1611 = vld [vmem:[#allocation5 + $0x328] sm:$0xf]
    %v1612 = vld [vmem:[#allocation5 + $0x32c] sm:$0xf]
    %v1613 = vld [vmem:[#allocation5 + $0x330] sm:$0xf]
    %v1614 = vld [vmem:[#allocation5 + $0x334] sm:$0xf]
    %v1615 = vld [vmem:[#allocation5 + $0x338] sm:$0xf]
    %v1616 = vld [vmem:[#allocation5 + $0x33c] sm:$0xf]
    %v1617 = vld [vmem:[#allocation5 + $0x340] sm:$0xf]
    %v1618 = vld [vmem:[#allocation5 + $0x344] sm:$0xf]
    %v1619 = vld [vmem:[#allocation5 + $0x348] sm:$0xf]
    %v1620 = vld [vmem:[#allocation5 + $0x34c] sm:$0xf]
    %v1621 = vld [vmem:[#allocation5 + $0x350] sm:$0xf]
    %v1622 = vld [vmem:[#allocation5 + $0x354] sm:$0xf]
    %v1623 = vld [vmem:[#allocation5 + $0x358] sm:$0xf]
    %v1624 = vld [vmem:[#allocation5 + $0x35c] sm:$0xf]
    %v1625 = vld [vmem:[#allocation5 + $0x360] sm:$0xf]
    %v1626 = vld [vmem:[#allocation5 + $0x364] sm:$0xf]
    %v1627 = vld [vmem:[#allocation5 + $0x368] sm:$0xf]
    %v1628 = vld [vmem:[#allocation5 + $0x36c] sm:$0xf]
    %v1629 = vld [vmem:[#allocation5 + $0x370] sm:$0xf]
    %v1630 = vld [vmem:[#allocation5 + $0x374] sm:$0xf]
    %v1631 = vld [vmem:[#allocation5 + $0x378] sm:$0xf]
    %v1632 = vld [vmem:[#allocation5 + $0x37c] sm:$0xf]
    %v1633 = vld [vmem:[#allocation5 + $0x380] sm:$0xf]
    %v1634 = vld [vmem:[#allocation5 + $0x384] sm:$0xf]
    %v1635 = vld [vmem:[#allocation5 + $0x388] sm:$0xf]
    %v1636 = vld [vmem:[#allocation5 + $0x38c] sm:$0xf]
    %v1637 = vld [vmem:[#allocation5 + $0x390] sm:$0xf]
    %v1638 = vld [vmem:[#allocation5 + $0x394] sm:$0xf]
    %v1639 = vld [vmem:[#allocation5 + $0x398] sm:$0xf]
    %v1640 = vld [vmem:[#allocation5 + $0x39c] sm:$0xf]
    %v1641 = vld [vmem:[#allocation5 + $0x3a0] sm:$0xf]
    %v1642 = vld [vmem:[#allocation5 + $0x3a4] sm:$0xf]
    %v1643 = vld [vmem:[#allocation5 + $0x3a8] sm:$0xf]
    %v1644 = vld [vmem:[#allocation5 + $0x3ac] sm:$0xf]
    %v1645 = vld [vmem:[#allocation5 + $0x3b0] sm:$0xf]
    %v1646 = vld [vmem:[#allocation5 + $0x3b4] sm:$0xf]
    %v1647 = vld [vmem:[#allocation5 + $0x3b8] sm:$0xf]
    %v1648 = vld [vmem:[#allocation5 + $0x3bc] sm:$0xf]
    %v1649 = vld [vmem:[#allocation5 + $0x3c0] sm:$0xf]
    %v1650 = vld [vmem:[#allocation5 + $0x3c4] sm:$0xf]
    %v1651 = vld [vmem:[#allocation5 + $0x3c8] sm:$0xf]
    %v1652 = vld [vmem:[#allocation5 + $0x3cc] sm:$0xf]
    %v1653 = vld [vmem:[#allocation5 + $0x3d0] sm:$0xf]
    %v1654 = vld [vmem:[#allocation5 + $0x3d4] sm:$0xf]
    %v1655 = vld [vmem:[#allocation5 + $0x3d8] sm:$0xf]
    %v1656 = vld [vmem:[#allocation5 + $0x3dc] sm:$0xf]
    %v1657 = vld [vmem:[#allocation5 + $0x3e0] sm:$0xf]
    %v1658 = vld [vmem:[#allocation5 + $0x3e4] sm:$0xf]
    %v1659 = vld [vmem:[#allocation5 + $0x3e8] sm:$0xf]
    %v1660 = vld [vmem:[#allocation5 + $0x3ec] sm:$0xf]
    %v1661 = vld [vmem:[#allocation5 + $0x3f0] sm:$0xf]
    %v1662 = vld [vmem:[#allocation5 + $0x3f4] sm:$0xf]
    %v1663 = vld [vmem:[#allocation5 + $0x3f8] sm:$0xf]
    %v1664 = vld [vmem:[#allocation5 + $0x3fc] sm:$0xf]
    %v1665 = vld [vmem:[%s4] sm:$0x1]
    %v1666 = vunpack.c.l.bf16 %v1665
    %v1667 = vlaneseq
    %v1668 = vshrl.u32 %v1667, 7
    %v1669 = vsub.s32 0, %v1668
    %v1670 = vrot.slane %v1666, %v1669
    %v1927 = vunpack.c.l.b16 %v1409
    %v1928 = vunpack.c.l.b16 %v1410
    %v1929 = vunpack.c.l.b16 %v1411
    %v1930 = vunpack.c.l.b16 %v1412
    %v1931 = vunpack.c.l.b16 %v1413
    %v1932 = vunpack.c.l.b16 %v1414
    %v1933 = vunpack.c.l.b16 %v1415
    %v1934 = vunpack.c.l.b16 %v1416
    %v1935 = vunpack.c.l.b16 %v1417
    %v1936 = vunpack.c.l.b16 %v1418
    %v1937 = vunpack.c.l.b16 %v1419
    %v1938 = vunpack.c.l.b16 %v1420
    %v1939 = vunpack.c.l.b16 %v1421
    %v1940 = vunpack.c.l.b16 %v1422
    %v1941 = vunpack.c.l.b16 %v1423
    %v1942 = vunpack.c.l.b16 %v1424
    %v1943 = vunpack.c.l.b16 %v1425
    %v1944 = vunpack.c.l.b16 %v1426
    %v1945 = vunpack.c.l.b16 %v1427
    %v1946 = vunpack.c.l.b16 %v1428
    %v1947 = vunpack.c.l.b16 %v1429
    %v1948 = vunpack.c.l.b16 %v1430
    %v1949 = vunpack.c.l.b16 %v1431
    %v1950 = vunpack.c.l.b16 %v1432
    %v1951 = vunpack.c.l.b16 %v1433
    %v1952 = vunpack.c.l.b16 %v1434
    %v1953 = vunpack.c.l.b16 %v1435
    %v1954 = vunpack.c.l.b16 %v1436
    %v1955 = vunpack.c.l.b16 %v1437
    %v1956 = vunpack.c.l.b16 %v1438
    %v1957 = vunpack.c.l.b16 %v1439
    %v1958 = vunpack.c.l.b16 %v1440
    %v1959 = vunpack.c.l.b16 %v1441
    %v1960 = vunpack.c.l.b16 %v1442
    %v1961 = vunpack.c.l.b16 %v1443
    %v1962 = vunpack.c.l.b16 %v1444
    %v1963 = vunpack.c.l.b16 %v1445
    %v1964 = vunpack.c.l.b16 %v1446
    %v1965 = vunpack.c.l.b16 %v1447
    %v1966 = vunpack.c.l.b16 %v1448
    %v1967 = vunpack.c.l.b16 %v1449
    %v1968 = vunpack.c.l.b16 %v1450
    %v1969 = vunpack.c.l.b16 %v1451
    %v1970 = vunpack.c.l.b16 %v1452
    %v1971 = vunpack.c.l.b16 %v1453
    %v1972 = vunpack.c.l.b16 %v1454
    %v1973 = vunpack.c.l.b16 %v1455
    %v1974 = vunpack.c.l.b16 %v1456
    %v1975 = vunpack.c.l.b16 %v1457
    %v1976 = vunpack.c.l.b16 %v1458
    %v1977 = vunpack.c.l.b16 %v1459
    %v1978 = vunpack.c.l.b16 %v1460
    %v1979 = vunpack.c.l.b16 %v1461
    %v1980 = vunpack.c.l.b16 %v1462
    %v1981 = vunpack.c.l.b16 %v1463
    %v1982 = vunpack.c.l.b16 %v1464
    %v1983 = vunpack.c.l.b16 %v1465
    %v1984 = vunpack.c.l.b16 %v1466
    %v1985 = vunpack.c.l.b16 %v1467
    %v1986 = vunpack.c.l.b16 %v1468
    %v1987 = vunpack.c.l.b16 %v1469
    %v1988 = vunpack.c.l.b16 %v1470
    %v1989 = vunpack.c.l.b16 %v1471
    %v1990 = vunpack.c.l.b16 %v1472
    %v1991 = vunpack.c.l.b16 %v1473
    %v1992 = vunpack.c.l.b16 %v1474
    %v1993 = vunpack.c.l.b16 %v1475
    %v1994 = vunpack.c.l.b16 %v1476
    %v1995 = vunpack.c.l.b16 %v1477
    %v1996 = vunpack.c.l.b16 %v1478
    %v1997 = vunpack.c.l.b16 %v1479
    %v1998 = vunpack.c.l.b16 %v1480
    %v1999 = vunpack.c.l.b16 %v1481
    %v2000 = vunpack.c.l.b16 %v1482
    %v2001 = vunpack.c.l.b16 %v1483
    %v2002 = vunpack.c.l.b16 %v1484
    %v2003 = vunpack.c.l.b16 %v1485
    %v2004 = vunpack.c.l.b16 %v1486
    %v2005 = vunpack.c.l.b16 %v1487
    %v2006 = vunpack.c.l.b16 %v1488
    %v2007 = vunpack.c.l.b16 %v1489
    %v2008 = vunpack.c.l.b16 %v1490
    %v2009 = vunpack.c.l.b16 %v1491
    %v2010 = vunpack.c.l.b16 %v1492
    %v2011 = vunpack.c.l.b16 %v1493
    %v2012 = vunpack.c.l.b16 %v1494
    %v2013 = vunpack.c.l.b16 %v1495
    %v2014 = vunpack.c.l.b16 %v1496
    %v2015 = vunpack.c.l.b16 %v1497
    %v2016 = vunpack.c.l.b16 %v1498
    %v2017 = vunpack.c.l.b16 %v1499
    %v2018 = vunpack.c.l.b16 %v1500
    %v2019 = vunpack.c.l.b16 %v1501
    %v2020 = vunpack.c.l.b16 %v1502
    %v2021 = vunpack.c.l.b16 %v1503
    %v2022 = vunpack.c.l.b16 %v1504
    %v2023 = vunpack.c.l.b16 %v1505
    %v2024 = vunpack.c.l.b16 %v1506
    %v2025 = vunpack.c.l.b16 %v1507
    %v2026 = vunpack.c.l.b16 %v1508
    %v2027 = vunpack.c.l.b16 %v1509
    %v2028 = vunpack.c.l.b16 %v1510
    %v2029 = vunpack.c.l.b16 %v1511
    %v2030 = vunpack.c.l.b16 %v1512
    %v2031 = vunpack.c.l.b16 %v1513
    %v2032 = vunpack.c.l.b16 %v1514
    %v2033 = vunpack.c.l.b16 %v1515
    %v2034 = vunpack.c.l.b16 %v1516
    %v2035 = vunpack.c.l.b16 %v1517
    %v2036 = vunpack.c.l.b16 %v1518
    %v2037 = vunpack.c.l.b16 %v1519
    %v2038 = vunpack.c.l.b16 %v1520
    %v2039 = vunpack.c.l.b16 %v1521
    %v2040 = vunpack.c.l.b16 %v1522
    %v2041 = vunpack.c.l.b16 %v1523
    %v2042 = vunpack.c.l.b16 %v1524
    %v2043 = vunpack.c.l.b16 %v1525
    %v2044 = vunpack.c.l.b16 %v1526
    %v2045 = vunpack.c.l.b16 %v1527
    %v2046 = vunpack.c.l.b16 %v1528
    %v2047 = vunpack.c.l.b16 %v1529
    %v2048 = vunpack.c.l.b16 %v1530
    %v2049 = vunpack.c.l.b16 %v1531
    %v2050 = vunpack.c.l.b16 %v1532
    %v2051 = vunpack.c.l.b16 %v1533
    %v2052 = vunpack.c.l.b16 %v1534
    %v2053 = vunpack.c.l.b16 %v1535
    %v2054 = vunpack.c.l.b16 %v1536
    %v2055 = vunpack.c.l.b16 %v1537
    %v2056 = vunpack.c.l.b16 %v1538
    %v2057 = vunpack.c.l.b16 %v1539
    %v2058 = vunpack.c.l.b16 %v1540
    %v2059 = vunpack.c.l.b16 %v1541
    %v2060 = vunpack.c.l.b16 %v1542
    %v2061 = vunpack.c.l.b16 %v1543
    %v2062 = vunpack.c.l.b16 %v1544
    %v2063 = vunpack.c.l.b16 %v1545
    %v2064 = vunpack.c.l.b16 %v1546
    %v2065 = vunpack.c.l.b16 %v1547
    %v2066 = vunpack.c.l.b16 %v1548
    %v2067 = vunpack.c.l.b16 %v1549
    %v2068 = vunpack.c.l.b16 %v1550
    %v2069 = vunpack.c.l.b16 %v1551
    %v2070 = vunpack.c.l.b16 %v1552
    %v2071 = vunpack.c.l.b16 %v1553
    %v2072 = vunpack.c.l.b16 %v1554
    %v2073 = vunpack.c.l.b16 %v1555
    %v2074 = vunpack.c.l.b16 %v1556
    %v2075 = vunpack.c.l.b16 %v1557
    %v2076 = vunpack.c.l.b16 %v1558
    %v2077 = vunpack.c.l.b16 %v1559
    %v2078 = vunpack.c.l.b16 %v1560
    %v2079 = vunpack.c.l.b16 %v1561
    %v2080 = vunpack.c.l.b16 %v1562
    %v2081 = vunpack.c.l.b16 %v1563
    %v2082 = vunpack.c.l.b16 %v1564
    %v2083 = vunpack.c.l.b16 %v1565
    %v2084 = vunpack.c.l.b16 %v1566
    %v2085 = vunpack.c.l.b16 %v1567
    %v2086 = vunpack.c.l.b16 %v1568
    %v2087 = vunpack.c.l.b16 %v1569
    %v2088 = vunpack.c.l.b16 %v1570
    %v2089 = vunpack.c.l.b16 %v1571
    %v2090 = vunpack.c.l.b16 %v1572
    %v2091 = vunpack.c.l.b16 %v1573
    %v2092 = vunpack.c.l.b16 %v1574
    %v2093 = vunpack.c.l.b16 %v1575
    %v2094 = vunpack.c.l.b16 %v1576
    %v2095 = vunpack.c.l.b16 %v1577
    %v2096 = vunpack.c.l.b16 %v1578
    %v2097 = vunpack.c.l.b16 %v1579
    %v2098 = vunpack.c.l.b16 %v1580
    %v2099 = vunpack.c.l.b16 %v1581
    %v2100 = vunpack.c.l.b16 %v1582
    %v2101 = vunpack.c.l.b16 %v1583
    %v2102 = vunpack.c.l.b16 %v1584
    %v2103 = vunpack.c.l.b16 %v1585
    %v2104 = vunpack.c.l.b16 %v1586
    %v2105 = vunpack.c.l.b16 %v1587
    %v2106 = vunpack.c.l.b16 %v1588
    %v2107 = vunpack.c.l.b16 %v1589
    %v2108 = vunpack.c.l.b16 %v1590
    %v2109 = vunpack.c.l.b16 %v1591
    %v2110 = vunpack.c.l.b16 %v1592
    %v2111 = vunpack.c.l.b16 %v1593
    %v2112 = vunpack.c.l.b16 %v1594
    %v2113 = vunpack.c.l.b16 %v1595
    %v2114 = vunpack.c.l.b16 %v1596
    %v2115 = vunpack.c.l.b16 %v1597
    %v2116 = vunpack.c.l.b16 %v1598
    %v2117 = vunpack.c.l.b16 %v1599
    %v2118 = vunpack.c.l.b16 %v1600
    %v2119 = vunpack.c.l.b16 %v1601
    %v2120 = vunpack.c.l.b16 %v1602
    %v2121 = vunpack.c.l.b16 %v1603
    %v2122 = vunpack.c.l.b16 %v1604
    %v2123 = vunpack.c.l.b16 %v1605
    %v2124 = vunpack.c.l.b16 %v1606
    %v2125 = vunpack.c.l.b16 %v1607
    %v2126 = vunpack.c.l.b16 %v1608
    %v2127 = vunpack.c.l.b16 %v1609
    %v2128 = vunpack.c.l.b16 %v1610
    %v2129 = vunpack.c.l.b16 %v1611
    %v2130 = vunpack.c.l.b16 %v1612
    %v2131 = vunpack.c.l.b16 %v1613
    %v2132 = vunpack.c.l.b16 %v1614
    %v2133 = vunpack.c.l.b16 %v1615
    %v2134 = vunpack.c.l.b16 %v1616
    %v2135 = vunpack.c.l.b16 %v1617
    %v2136 = vunpack.c.l.b16 %v1618
    %v2137 = vunpack.c.l.b16 %v1619
    %v2138 = vunpack.c.l.b16 %v1620
    %v2139 = vunpack.c.l.b16 %v1621
    %v2140 = vunpack.c.l.b16 %v1622
    %v2141 = vunpack.c.l.b16 %v1623
    %v2142 = vunpack.c.l.b16 %v1624
    %v2143 = vunpack.c.l.b16 %v1625
    %v2144 = vunpack.c.l.b16 %v1626
    %v2145 = vunpack.c.l.b16 %v1627
    %v2146 = vunpack.c.l.b16 %v1628
    %v2147 = vunpack.c.l.b16 %v1629
    %v2148 = vunpack.c.l.b16 %v1630
    %v2149 = vunpack.c.l.b16 %v1631
    %v2150 = vunpack.c.l.b16 %v1632
    %v2151 = vunpack.c.l.b16 %v1633
    %v2152 = vunpack.c.l.b16 %v1634
    %v2153 = vunpack.c.l.b16 %v1635
    %v2154 = vunpack.c.l.b16 %v1636
    %v2155 = vunpack.c.l.b16 %v1637
    %v2156 = vunpack.c.l.b16 %v1638
    %v2157 = vunpack.c.l.b16 %v1639
    %v2158 = vunpack.c.l.b16 %v1640
    %v2159 = vunpack.c.l.b16 %v1641
    %v2160 = vunpack.c.l.b16 %v1642
    %v2161 = vunpack.c.l.b16 %v1643
    %v2162 = vunpack.c.l.b16 %v1644
    %v2163 = vunpack.c.l.b16 %v1645
    %v2164 = vunpack.c.l.b16 %v1646
    %v2165 = vunpack.c.l.b16 %v1647
    %v2166 = vunpack.c.l.b16 %v1648
    %v2167 = vunpack.c.l.b16 %v1649
    %v2168 = vunpack.c.l.b16 %v1650
    %v2169 = vunpack.c.l.b16 %v1651
    %v2170 = vunpack.c.l.b16 %v1652
    %v2171 = vunpack.c.l.b16 %v1653
    %v2172 = vunpack.c.l.b16 %v1654
    %v2173 = vunpack.c.l.b16 %v1655
    %v2174 = vunpack.c.l.b16 %v1656
    %v2175 = vunpack.c.l.b16 %v1657
    %v2176 = vunpack.c.l.b16 %v1658
    %v2177 = vunpack.c.l.b16 %v1659
    %v2178 = vunpack.c.l.b16 %v1660
    %v2179 = vunpack.c.l.b16 %v1661
    %v2180 = vunpack.c.l.b16 %v1662
    %v2181 = vunpack.c.l.b16 %v1663
    %v2182 = vunpack.c.l.b16 %v1664
    %v2183 = vpack.c.b16 %v1928, %v1927
    %v2184 = vpack.c.b16 %v1930, %v1929
    %v2185 = vpack.c.b16 %v1932, %v1931
    %v2186 = vpack.c.b16 %v1934, %v1933
    %v2187 = vpack.c.b16 %v1936, %v1935
    %v2188 = vpack.c.b16 %v1938, %v1937
    %v2189 = vpack.c.b16 %v1940, %v1939
    %v2190 = vpack.c.b16 %v1942, %v1941
    %v2191 = vpack.c.b16 %v1944, %v1943
    %v2192 = vpack.c.b16 %v1946, %v1945
    %v2193 = vpack.c.b16 %v1948, %v1947
    %v2194 = vpack.c.b16 %v1950, %v1949
    %v2195 = vpack.c.b16 %v1952, %v1951
    %v2196 = vpack.c.b16 %v1954, %v1953
    %v2197 = vpack.c.b16 %v1956, %v1955
    %v2198 = vpack.c.b16 %v1958, %v1957
    %v2199 = vpack.c.b16 %v1960, %v1959
    %v2200 = vpack.c.b16 %v1962, %v1961
    %v2201 = vpack.c.b16 %v1964, %v1963
    %v2202 = vpack.c.b16 %v1966, %v1965
    %v2203 = vpack.c.b16 %v1968, %v1967
    %v2204 = vpack.c.b16 %v1970, %v1969
    %v2205 = vpack.c.b16 %v1972, %v1971
    %v2206 = vpack.c.b16 %v1974, %v1973
    %v2207 = vpack.c.b16 %v1976, %v1975
    %v2208 = vpack.c.b16 %v1978, %v1977
    %v2209 = vpack.c.b16 %v1980, %v1979
    %v2210 = vpack.c.b16 %v1982, %v1981
    %v2211 = vpack.c.b16 %v1984, %v1983
    %v2212 = vpack.c.b16 %v1986, %v1985
    %v2213 = vpack.c.b16 %v1988, %v1987
    %v2214 = vpack.c.b16 %v1990, %v1989
    %v2215 = vpack.c.b16 %v1992, %v1991
    %v2216 = vpack.c.b16 %v1994, %v1993
    %v2217 = vpack.c.b16 %v1996, %v1995
    %v2218 = vpack.c.b16 %v1998, %v1997
    %v2219 = vpack.c.b16 %v2000, %v1999
    %v2220 = vpack.c.b16 %v2002, %v2001
    %v2221 = vpack.c.b16 %v2004, %v2003
    %v2222 = vpack.c.b16 %v2006, %v2005
    %v2223 = vpack.c.b16 %v2008, %v2007
    %v2224 = vpack.c.b16 %v2010, %v2009
    %v2225 = vpack.c.b16 %v2012, %v2011
    %v2226 = vpack.c.b16 %v2014, %v2013
    %v2227 = vpack.c.b16 %v2016, %v2015
    %v2228 = vpack.c.b16 %v2018, %v2017
    %v2229 = vpack.c.b16 %v2020, %v2019
    %v2230 = vpack.c.b16 %v2022, %v2021
    %v2231 = vpack.c.b16 %v2024, %v2023
    %v2232 = vpack.c.b16 %v2026, %v2025
    %v2233 = vpack.c.b16 %v2028, %v2027
    %v2234 = vpack.c.b16 %v2030, %v2029
    %v2235 = vpack.c.b16 %v2032, %v2031
    %v2236 = vpack.c.b16 %v2034, %v2033
    %v2237 = vpack.c.b16 %v2036, %v2035
    %v2238 = vpack.c.b16 %v2038, %v2037
    %v2239 = vpack.c.b16 %v2040, %v2039
    %v2240 = vpack.c.b16 %v2042, %v2041
    %v2241 = vpack.c.b16 %v2044, %v2043
    %v2242 = vpack.c.b16 %v2046, %v2045
    %v2243 = vpack.c.b16 %v2048, %v2047
    %v2244 = vpack.c.b16 %v2050, %v2049
    %v2245 = vpack.c.b16 %v2052, %v2051
    %v2246 = vpack.c.b16 %v2054, %v2053
    %v2247 = vpack.c.b16 %v2056, %v2055
    %v2248 = vpack.c.b16 %v2058, %v2057
    %v2249 = vpack.c.b16 %v2060, %v2059
    %v2250 = vpack.c.b16 %v2062, %v2061
    %v2251 = vpack.c.b16 %v2064, %v2063
    %v2252 = vpack.c.b16 %v2066, %v2065
    %v2253 = vpack.c.b16 %v2068, %v2067
    %v2254 = vpack.c.b16 %v2070, %v2069
    %v2255 = vpack.c.b16 %v2072, %v2071
    %v2256 = vpack.c.b16 %v2074, %v2073
    %v2257 = vpack.c.b16 %v2076, %v2075
    %v2258 = vpack.c.b16 %v2078, %v2077
    %v2259 = vpack.c.b16 %v2080, %v2079
    %v2260 = vpack.c.b16 %v2082, %v2081
    %v2261 = vpack.c.b16 %v2084, %v2083
    %v2262 = vpack.c.b16 %v2086, %v2085
    %v2263 = vpack.c.b16 %v2088, %v2087
    %v2264 = vpack.c.b16 %v2090, %v2089
    %v2265 = vpack.c.b16 %v2092, %v2091
    %v2266 = vpack.c.b16 %v2094, %v2093
    %v2267 = vpack.c.b16 %v2096, %v2095
    %v2268 = vpack.c.b16 %v2098, %v2097
    %v2269 = vpack.c.b16 %v2100, %v2099
    %v2270 = vpack.c.b16 %v2102, %v2101
    %v2271 = vpack.c.b16 %v2104, %v2103
    %v2272 = vpack.c.b16 %v2106, %v2105
    %v2273 = vpack.c.b16 %v2108, %v2107
    %v2274 = vpack.c.b16 %v2110, %v2109
    %v2275 = vpack.c.b16 %v2112, %v2111
    %v2276 = vpack.c.b16 %v2114, %v2113
    %v2277 = vpack.c.b16 %v2116, %v2115
    %v2278 = vpack.c.b16 %v2118, %v2117
    %v2279 = vpack.c.b16 %v2120, %v2119
    %v2280 = vpack.c.b16 %v2122, %v2121
    %v2281 = vpack.c.b16 %v2124, %v2123
    %v2282 = vpack.c.b16 %v2126, %v2125
    %v2283 = vpack.c.b16 %v2128, %v2127
    %v2284 = vpack.c.b16 %v2130, %v2129
    %v2285 = vpack.c.b16 %v2132, %v2131
    %v2286 = vpack.c.b16 %v2134, %v2133
    %v2287 = vpack.c.b16 %v2136, %v2135
    %v2288 = vpack.c.b16 %v2138, %v2137
    %v2289 = vpack.c.b16 %v2140, %v2139
    %v2290 = vpack.c.b16 %v2142, %v2141
    %v2291 = vpack.c.b16 %v2144, %v2143
    %v2292 = vpack.c.b16 %v2146, %v2145
    %v2293 = vpack.c.b16 %v2148, %v2147
    %v2294 = vpack.c.b16 %v2150, %v2149
    %v2295 = vpack.c.b16 %v2152, %v2151
    %v2296 = vpack.c.b16 %v2154, %v2153
    %v2297 = vpack.c.b16 %v2156, %v2155
    %v2298 = vpack.c.b16 %v2158, %v2157
    %v2299 = vpack.c.b16 %v2160, %v2159
    %v2300 = vpack.c.b16 %v2162, %v2161
    %v2301 = vpack.c.b16 %v2164, %v2163
    %v2302 = vpack.c.b16 %v2166, %v2165
    %v2303 = vpack.c.b16 %v2168, %v2167
    %v2304 = vpack.c.b16 %v2170, %v2169
    %v2305 = vpack.c.b16 %v2172, %v2171
    %v2306 = vpack.c.b16 %v2174, %v2173
    %v2307 = vpack.c.b16 %v2176, %v2175
    %v2308 = vpack.c.b16 %v2178, %v2177
    %v2309 = vpack.c.b16 %v2180, %v2179
    %v2310 = vpack.c.b16 %v2182, %v2181
    %2439 = vmatprep.subr.bf16.mxu0 0
    %2440 = vmatpush1.bf16.msra.mxu0 %v2183
    %2441 = vmatprep.subr.bf16.mxu0 0
    %2442 = vmatpush1.bf16.msra.mxu0 %v2184
    %2443 = vmatprep.subr.bf16.mxu0 0
    %2444 = vmatpush1.bf16.msra.mxu0 %v2185
    %2445 = vmatprep.subr.bf16.mxu0 0
    %2446 = vmatpush1.bf16.msra.mxu0 %v2186
    %2447 = vmatprep.subr.bf16.mxu0 0
    %2448 = vmatpush1.bf16.msra.mxu0 %v2187
    %2449 = vmatprep.subr.bf16.mxu0 0
    %2450 = vmatpush1.bf16.msra.mxu0 %v2188
    %2451 = vmatprep.subr.bf16.mxu0 0
    %2452 = vmatpush1.bf16.msra.mxu0 %v2189
    %2453 = vmatprep.subr.bf16.mxu0 0
    %2454 = vmatpush1.bf16.msra.mxu0 %v2190
    %2455 = vmatprep.subr.bf16.mxu0 0
    %2456 = vmatpush1.bf16.msra.mxu0 %v2191
    %2457 = vmatprep.subr.bf16.mxu0 0
    %2458 = vmatpush1.bf16.msra.mxu0 %v2192
    %2459 = vmatprep.subr.bf16.mxu0 0
    %2460 = vmatpush1.bf16.msra.mxu0 %v2193
    %2461 = vmatprep.subr.bf16.mxu0 0
    %2462 = vmatpush1.bf16.msra.mxu0 %v2194
    %2463 = vmatprep.subr.bf16.mxu0 0
    %2464 = vmatpush1.bf16.msra.mxu0 %v2195
    %2465 = vmatprep.subr.bf16.mxu0 0
    %2466 = vmatpush1.bf16.msra.mxu0 %v2196
    %2467 = vmatprep.subr.bf16.mxu0 0
    %2468 = vmatpush1.bf16.msra.mxu0 %v2197
    %2469 = vmatprep.subr.bf16.mxu0 0
    %2470 = vmatpush1.bf16.msra.mxu0 %v2198
    %2471 = vmatprep.mubr.bf16.mxu0 %v1394
    %2472 = vmatmul.mubr.bf16.gmra.mrb[0].mxu0 %v1393
    %v2473 = vpop.f32.mrb[0].mxu0
    %v2474 = vadd.f32 %v1670, %v2473
    %v2475 = vpop.f32.mrb[0].mxu0
    %v2476 = vpop.f32.mrb[0].mxu0
    %v2477 = vpop.f32.mrb[0].mxu0
    %2478 = vdwg.mxu0
    %2479 = vmatprep.subr.bf16.mxu0 0
    %2480 = vmatpush1.bf16.msra.mxu0 %v2199
    %2481 = vmatprep.subr.bf16.mxu0 0
    %2482 = vmatpush1.bf16.msra.mxu0 %v2200
    %2483 = vmatprep.subr.bf16.mxu0 0
    %2484 = vmatpush1.bf16.msra.mxu0 %v2201
    %2485 = vmatprep.subr.bf16.mxu0 0
    %2486 = vmatpush1.bf16.msra.mxu0 %v2202
    %2487 = vmatprep.subr.bf16.mxu0 0
    %2488 = vmatpush1.bf16.msra.mxu0 %v2203
    %2489 = vmatprep.subr.bf16.mxu0 0
    %2490 = vmatpush1.bf16.msra.mxu0 %v2204
    %2491 = vmatprep.subr.bf16.mxu0 0
    %2492 = vmatpush1.bf16.msra.mxu0 %v2205
    %2493 = vmatprep.subr.bf16.mxu0 0
    %2494 = vmatpush1.bf16.msra.mxu0 %v2206
    %2495 = vmatprep.subr.bf16.mxu0 0
    %2496 = vmatpush1.bf16.msra.mxu0 %v2207
    %2497 = vmatprep.subr.bf16.mxu0 0
    %2498 = vmatpush1.bf16.msra.mxu0 %v2208
    %2499 = vmatprep.subr.bf16.mxu0 0
    %2500 = vmatpush1.bf16.msra.mxu0 %v2209
    %2501 = vmatprep.subr.bf16.mxu0 0
    %2502 = vmatpush1.bf16.msra.mxu0 %v2210
    %2503 = vmatprep.subr.bf16.mxu0 0
    %2504 = vmatpush1.bf16.msra.mxu0 %v2211
    %2505 = vmatprep.subr.bf16.mxu0 0
    %2506 = vmatpush1.bf16.msra.mxu0 %v2212
    %2507 = vmatprep.subr.bf16.mxu0 0
    %2508 = vmatpush1.bf16.msra.mxu0 %v2213
    %2509 = vmatprep.subr.bf16.mxu0 0
    %2510 = vmatpush1.bf16.msra.mxu0 %v2214
    %2511 = vmatprep.mubr.bf16.mxu0 %v1396
    %2512 = vmatmul.mubr.bf16.gmra.mrb[0].mxu0 %v1395
    %v2513 = vpop.f32.mrb[0].mxu0
    %v2514 = vadd.f32 %v2474, %v2513
    %v2515 = vpop.f32.mrb[0].mxu0
    %v2516 = vpop.f32.mrb[0].mxu0
    %v2517 = vpop.f32.mrb[0].mxu0
    %2518 = vdwg.mxu0
    %2519 = vmatprep.subr.bf16.mxu0 0
    %2520 = vmatpush1.bf16.msra.mxu0 %v2215
    %2521 = vmatprep.subr.bf16.mxu0 0
    %2522 = vmatpush1.bf16.msra.mxu0 %v2216
    %2523 = vmatprep.subr.bf16.mxu0 0
    %2524 = vmatpush1.bf16.msra.mxu0 %v2217
    %2525 = vmatprep.subr.bf16.mxu0 0
    %2526 = vmatpush1.bf16.msra.mxu0 %v2218
    %2527 = vmatprep.subr.bf16.mxu0 0
    %2528 = vmatpush1.bf16.msra.mxu0 %v2219
    %2529 = vmatprep.subr.bf16.mxu0 0
    %2530 = vmatpush1.bf16.msra.mxu0 %v2220
    %2531 = vmatprep.subr.bf16.mxu0 0
    %2532 = vmatpush1.bf16.msra.mxu0 %v2221
    %2533 = vmatprep.subr.bf16.mxu0 0
    %2534 = vmatpush1.bf16.msra.mxu0 %v2222
    %2535 = vmatprep.subr.bf16.mxu0 0
    %2536 = vmatpush1.bf16.msra.mxu0 %v2223
    %2537 = vmatprep.subr.bf16.mxu0 0
    %2538 = vmatpush1.bf16.msra.mxu0 %v2224
    %2539 = vmatprep.subr.bf16.mxu0 0
    %2540 = vmatpush1.bf16.msra.mxu0 %v2225
    %2541 = vmatprep.subr.bf16.mxu0 0
    %2542 = vmatpush1.bf16.msra.mxu0 %v2226
    %2543 = vmatprep.subr.bf16.mxu0 0
    %2544 = vmatpush1.bf16.msra.mxu0 %v2227
    %2545 = vmatprep.subr.bf16.mxu0 0
    %2546 = vmatpush1.bf16.msra.mxu0 %v2228
    %2547 = vmatprep.subr.bf16.mxu0 0
    %2548 = vmatpush1.bf16.msra.mxu0 %v2229
    %2549 = vmatprep.subr.bf16.mxu0 0
    %2550 = vmatpush1.bf16.msra.mxu0 %v2230
    %2551 = vmatprep.mubr.bf16.mxu0 %v1398
    %2552 = vmatmul.mubr.bf16.gmra.mrb[0].mxu0 %v1397
    %v2553 = vpop.f32.mrb[0].mxu0
    %v2554 = vadd.f32 %v2514, %v2553
    %v2555 = vpop.f32.mrb[0].mxu0
    %v2556 = vpop.f32.mrb[0].mxu0
    %v2557 = vpop.f32.mrb[0].mxu0
    %2558 = vdwg.mxu0
    %2559 = vmatprep.subr.bf16.mxu0 0
    %2560 = vmatpush1.bf16.msra.mxu0 %v2231
    %2561 = vmatprep.subr.bf16.mxu0 0
    %2562 = vmatpush1.bf16.msra.mxu0 %v2232
    %2563 = vmatprep.subr.bf16.mxu0 0
    %2564 = vmatpush1.bf16.msra.mxu0 %v2233
    %2565 = vmatprep.subr.bf16.mxu0 0
    %2566 = vmatpush1.bf16.msra.mxu0 %v2234
    %2567 = vmatprep.subr.bf16.mxu0 0
    %2568 = vmatpush1.bf16.msra.mxu0 %v2235
    %2569 = vmatprep.subr.bf16.mxu0 0
    %2570 = vmatpush1.bf16.msra.mxu0 %v2236
    %2571 = vmatprep.subr.bf16.mxu0 0
    %2572 = vmatpush1.bf16.msra.mxu0 %v2237
    %2573 = vmatprep.subr.bf16.mxu0 0
    %2574 = vmatpush1.bf16.msra.mxu0 %v2238
    %2575 = vmatprep.subr.bf16.mxu0 0
    %2576 = vmatpush1.bf16.msra.mxu0 %v2239
    %2577 = vmatprep.subr.bf16.mxu0 0
    %2578 = vmatpush1.bf16.msra.mxu0 %v2240
    %2579 = vmatprep.subr.bf16.mxu0 0
    %2580 = vmatpush1.bf16.msra.mxu0 %v2241
    %2581 = vmatprep.subr.bf16.mxu0 0
    %2582 = vmatpush1.bf16.msra.mxu0 %v2242
    %2583 = vmatprep.subr.bf16.mxu0 0
    %2584 = vmatpush1.bf16.msra.mxu0 %v2243
    %2585 = vmatprep.subr.bf16.mxu0 0
    %2586 = vmatpush1.bf16.msra.mxu0 %v2244
    %2587 = vmatprep.subr.bf16.mxu0 0
    %2588 = vmatpush1.bf16.msra.mxu0 %v2245
    %2589 = vmatprep.subr.bf16.mxu0 0
    %2590 = vmatpush1.bf16.msra.mxu0 %v2246
    %2591 = vmatprep.mubr.bf16.mxu0 %v1400
    %2592 = vmatmul.mubr.bf16.gmra.mrb[0].mxu0 %v1399
    %v2593 = vpop.f32.mrb[0].mxu0
    %v2594 = vadd.f32 %v2554, %v2593
    %v2595 = vpop.f32.mrb[0].mxu0
    %v2596 = vpop.f32.mrb[0].mxu0
    %v2597 = vpop.f32.mrb[0].mxu0
    %2598 = vdwg.mxu0
    %2599 = vmatprep.subr.bf16.mxu0 0
    %2600 = vmatpush1.bf16.msra.mxu0 %v2247
    %2601 = vmatprep.subr.bf16.mxu0 0
    %2602 = vmatpush1.bf16.msra.mxu0 %v2248
    %2603 = vmatprep.subr.bf16.mxu0 0
    %2604 = vmatpush1.bf16.msra.mxu0 %v2249
    %2605 = vmatprep.subr.bf16.mxu0 0
    %2606 = vmatpush1.bf16.msra.mxu0 %v2250
    %2607 = vmatprep.subr.bf16.mxu0 0
    %2608 = vmatpush1.bf16.msra.mxu0 %v2251
    %2609 = vmatprep.subr.bf16.mxu0 0
    %2610 = vmatpush1.bf16.msra.mxu0 %v2252
    %2611 = vmatprep.subr.bf16.mxu0 0
    %2612 = vmatpush1.bf16.msra.mxu0 %v2253
    %2613 = vmatprep.subr.bf16.mxu0 0
    %2614 = vmatpush1.bf16.msra.mxu0 %v2254
    %2615 = vmatprep.subr.bf16.mxu0 0
    %2616 = vmatpush1.bf16.msra.mxu0 %v2255
    %2617 = vmatprep.subr.bf16.mxu0 0
    %2618 = vmatpush1.bf16.msra.mxu0 %v2256
    %2619 = vmatprep.subr.bf16.mxu0 0
    %2620 = vmatpush1.bf16.msra.mxu0 %v2257
    %2621 = vmatprep.subr.bf16.mxu0 0
    %2622 = vmatpush1.bf16.msra.mxu0 %v2258
    %2623 = vmatprep.subr.bf16.mxu0 0
    %2624 = vmatpush1.bf16.msra.mxu0 %v2259
    %2625 = vmatprep.subr.bf16.mxu0 0
    %2626 = vmatpush1.bf16.msra.mxu0 %v2260
    %2627 = vmatprep.subr.bf16.mxu0 0
    %2628 = vmatpush1.bf16.msra.mxu0 %v2261
    %2629 = vmatprep.subr.bf16.mxu0 0
    %2630 = vmatpush1.bf16.msra.mxu0 %v2262
    %2631 = vmatprep.mubr.bf16.mxu0 %v1402
    %2632 = vmatmul.mubr.bf16.gmra.mrb[0].mxu0 %v1401
    %v2633 = vpop.f32.mrb[0].mxu0
    %v2634 = vadd.f32 %v2594, %v2633
    %v2635 = vpop.f32.mrb[0].mxu0
    %v2636 = vpop.f32.mrb[0].mxu0
    %v2637 = vpop.f32.mrb[0].mxu0
    %2638 = vdwg.mxu0
    %2639 = vmatprep.subr.bf16.mxu0 0
    %2640 = vmatpush1.bf16.msra.mxu0 %v2263
    %2641 = vmatprep.subr.bf16.mxu0 0
    %2642 = vmatpush1.bf16.msra.mxu0 %v2264
    %2643 = vmatprep.subr.bf16.mxu0 0
    %2644 = vmatpush1.bf16.msra.mxu0 %v2265
    %2645 = vmatprep.subr.bf16.mxu0 0
    %2646 = vmatpush1.bf16.msra.mxu0 %v2266
    %2647 = vmatprep.subr.bf16.mxu0 0
    %2648 = vmatpush1.bf16.msra.mxu0 %v2267
    %2649 = vmatprep.subr.bf16.mxu0 0
    %2650 = vmatpush1.bf16.msra.mxu0 %v2268
    %2651 = vmatprep.subr.bf16.mxu0 0
    %2652 = vmatpush1.bf16.msra.mxu0 %v2269
    %2653 = vmatprep.subr.bf16.mxu0 0
    %2654 = vmatpush1.bf16.msra.mxu0 %v2270
    %2655 = vmatprep.subr.bf16.mxu0 0
    %2656 = vmatpush1.bf16.msra.mxu0 %v2271
    %2657 = vmatprep.subr.bf16.mxu0 0
    %2658 = vmatpush1.bf16.msra.mxu0 %v2272
    %2659 = vmatprep.subr.bf16.mxu0 0
    %2660 = vmatpush1.bf16.msra.mxu0 %v2273
    %2661 = vmatprep.subr.bf16.mxu0 0
    %2662 = vmatpush1.bf16.msra.mxu0 %v2274
    %2663 = vmatprep.subr.bf16.mxu0 0
    %2664 = vmatpush1.bf16.msra.mxu0 %v2275
    %2665 = vmatprep.subr.bf16.mxu0 0
    %2666 = vmatpush1.bf16.msra.mxu0 %v2276
    %2667 = vmatprep.subr.bf16.mxu0 0
    %2668 = vmatpush1.bf16.msra.mxu0 %v2277
    %2669 = vmatprep.subr.bf16.mxu0 0
    %2670 = vmatpush1.bf16.msra.mxu0 %v2278
    %2671 = vmatprep.mubr.bf16.mxu0 %v1404
    %2672 = vmatmul.mubr.bf16.gmra.mrb[0].mxu0 %v1403
    %v2673 = vpop.f32.mrb[0].mxu0
    %v2674 = vadd.f32 %v2634, %v2673
    %v2675 = vpop.f32.mrb[0].mxu0
    %v2676 = vpop.f32.mrb[0].mxu0
    %v2677 = vpop.f32.mrb[0].mxu0
    %2678 = vdwg.mxu0
    %2679 = vmatprep.subr.bf16.mxu0 0
    %2680 = vmatpush1.bf16.msra.mxu0 %v2279
    %2681 = vmatprep.subr.bf16.mxu0 0
    %2682 = vmatpush1.bf16.msra.mxu0 %v2280
    %2683 = vmatprep.subr.bf16.mxu0 0
    %2684 = vmatpush1.bf16.msra.mxu0 %v2281
    %2685 = vmatprep.subr.bf16.mxu0 0
    %2686 = vmatpush1.bf16.msra.mxu0 %v2282
    %2687 = vmatprep.subr.bf16.mxu0 0
    %2688 = vmatpush1.bf16.msra.mxu0 %v2283
    %2689 = vmatprep.subr.bf16.mxu0 0
    %2690 = vmatpush1.bf16.msra.mxu0 %v2284
    %2691 = vmatprep.subr.bf16.mxu0 0
    %2692 = vmatpush1.bf16.msra.mxu0 %v2285
    %2693 = vmatprep.subr.bf16.mxu0 0
    %2694 = vmatpush1.bf16.msra.mxu0 %v2286
    %2695 = vmatprep.subr.bf16.mxu0 0
    %2696 = vmatpush1.bf16.msra.mxu0 %v2287
    %2697 = vmatprep.subr.bf16.mxu0 0
    %2698 = vmatpush1.bf16.msra.mxu0 %v2288
    %2699 = vmatprep.subr.bf16.mxu0 0
    %2700 = vmatpush1.bf16.msra.mxu0 %v2289
    %2701 = vmatprep.subr.bf16.mxu0 0
    %2702 = vmatpush1.bf16.msra.mxu0 %v2290
    %2703 = vmatprep.subr.bf16.mxu0 0
    %2704 = vmatpush1.bf16.msra.mxu0 %v2291
    %2705 = vmatprep.subr.bf16.mxu0 0
    %2706 = vmatpush1.bf16.msra.mxu0 %v2292
    %2707 = vmatprep.subr.bf16.mxu0 0
    %2708 = vmatpush1.bf16.msra.mxu0 %v2293
    %2709 = vmatprep.subr.bf16.mxu0 0
    %2710 = vmatpush1.bf16.msra.mxu0 %v2294
    %2711 = vmatprep.mubr.bf16.mxu0 %v1406
    %2712 = vmatmul.mubr.bf16.gmra.mrb[0].mxu0 %v1405
    %v2713 = vpop.f32.mrb[0].mxu0
    %v2714 = vadd.f32 %v2674, %v2713
    %v2715 = vpop.f32.mrb[0].mxu0
    %v2716 = vpop.f32.mrb[0].mxu0
    %v2717 = vpop.f32.mrb[0].mxu0
    %2718 = vdwg.mxu0
    %2719 = vmatprep.subr.bf16.mxu0 0
    %2720 = vmatpush1.bf16.msra.mxu0 %v2295
    %2721 = vmatprep.subr.bf16.mxu0 0
    %2722 = vmatpush1.bf16.msra.mxu0 %v2296
    %2723 = vmatprep.subr.bf16.mxu0 0
    %2724 = vmatpush1.bf16.msra.mxu0 %v2297
    %2725 = vmatprep.subr.bf16.mxu0 0
    %2726 = vmatpush1.bf16.msra.mxu0 %v2298
    %2727 = vmatprep.subr.bf16.mxu0 0
    %2728 = vmatpush1.bf16.msra.mxu0 %v2299
    %2729 = vmatprep.subr.bf16.mxu0 0
    %2730 = vmatpush1.bf16.msra.mxu0 %v2300
    %2731 = vmatprep.subr.bf16.mxu0 0
    %2732 = vmatpush1.bf16.msra.mxu0 %v2301
    %2733 = vmatprep.subr.bf16.mxu0 0
    %2734 = vmatpush1.bf16.msra.mxu0 %v2302
    %2735 = vmatprep.subr.bf16.mxu0 0
    %2736 = vmatpush1.bf16.msra.mxu0 %v2303
    %2737 = vmatprep.subr.bf16.mxu0 0
    %2738 = vmatpush1.bf16.msra.mxu0 %v2304
    %2739 = vmatprep.subr.bf16.mxu0 0
    %2740 = vmatpush1.bf16.msra.mxu0 %v2305
    %2741 = vmatprep.subr.bf16.mxu0 0
    %2742 = vmatpush1.bf16.msra.mxu0 %v2306
    %2743 = vmatprep.subr.bf16.mxu0 0
    %2744 = vmatpush1.bf16.msra.mxu0 %v2307
    %2745 = vmatprep.subr.bf16.mxu0 0
    %2746 = vmatpush1.bf16.msra.mxu0 %v2308
    %2747 = vmatprep.subr.bf16.mxu0 0
    %2748 = vmatpush1.bf16.msra.mxu0 %v2309
    %2749 = vmatprep.subr.bf16.mxu0 0
    %2750 = vmatpush1.bf16.msra.mxu0 %v2310
    %2751 = vmatprep.mubr.bf16.mxu0 %v1408
    %2752 = vmatmul.mubr.bf16.gmra.mrb[0].mxu0 %v1407
    %v2753 = vpop.f32.mrb[0].mxu0
    %v2754 = vadd.f32 %v2714, %v2753
    %v2755 = vpop.f32.mrb[0].mxu0
    %v2756 = vpop.f32.mrb[0].mxu0
    %v2757 = vpop.f32.mrb[0].mxu0
    %2758 = vdwg.mxu0
    %v2759 = vpack.c.bf16 %v2754, %v2754
    %2760 = vst [vmem:[#allocation7] sm:$0xf] %v2759
    // Predicated region
    $region30: #{projector_forward.1} parent=1 // pred_check
      _
    $region31: #{projector_forward.1} parent=1 // pred_check_branch
      %2762 = sbr.rel (0) target = $region33
    $region32: #{projector_forward.1} parent=1 // pred_region
      %s2764 = ssub.s32 64, 64
      %2765 = vsyncadd [#allocation4], %s2764
      %s2767 = sshll.u32 [#allocation7], 4
      %s2768 = int_to_ptr.vmem [resolvable:$true] %s2767
      %2770 = dma.vmem_to_hbm [thread:$0]  %s2768, 64, %s5, [#allocation4]
    $region33: #{projector_forward.1} parent=1 // pred_fallthru
      _
    // Predicated region
    $region34: #{projector_forward.1} parent=1 // pred_check
      _
    $region35: #{projector_forward.1} parent=1 // pred_check_branch
      %2772 = sbr.rel (0) target = $region37
    $region36: #{projector_forward.1} parent=1 // pred_region
      %2773 = dma.done [#allocation4], 64
    $region37: #{projector_forward.1} parent=1 // pred_fallthru
      _
    %2774 = vsyncpa [#allocation3], 1
    %2775 = vsyncpa [#allocation6], 1
    %2776 = vsyncpa [#allocation4], 1

</llo_original>
